<compile_context>
chip_gen: v7x
topology: tpu7x:2x2x1
jax: 0.10.0
libtpu: 0.0.40
codegen_flags: <defaults>
</compile_context>

<pallas_src>
import functools
import math

import jax
import jax.numpy as jnp
from jax.experimental import pallas as pl
from jax.experimental.pallas import tpu as pltpu


# ----------------------------- helpers --------------------------------------

def _layernorm(x, gamma, beta, eps=1e-5):
    # x: (..., D), gamma/beta: (1, D) -- matches nn.LayerNorm(eps=1e-5)
    mu = jnp.mean(x, axis=-1, keepdims=True)
    xc = x - mu
    var = jnp.mean(xc * xc, axis=-1, keepdims=True)
    return xc * jax.lax.rsqrt(var + eps) * gamma + beta


def _device_kind():
    try:
        return jax.devices()[0].device_kind.lower()
    except Exception:
        return ""


def _tile_cap():
    # v5e MXU is 128x128 -> 128-row tiles already saturate it; 256 for v6e/v7x.
    return 128 if "v5" in _device_kind() else 256


def _choose_seq_tile(S, cap=None):
    cap = cap or _tile_cap()
    for t in (256, 128, 64, 32, 16, 8):
        if t <= cap and t <= S and S % t == 0:
            return t
    return S


def _vmem_limit_bytes(est_bytes):
    # v7x has 64 MiB of physical VMEM per TensorCore; v5e/v6e have 128 MiB.
    phys = (64 << 20) if "v7" in _device_kind() else (128 << 20)
    cap = (phys * 3) // 4                     # leave headroom for Mosaic scratch
    want = max(2 * est_bytes, 32 << 20)
    return int(min(want, cap))


def _const_spec(shape, grid_rank, single_buffer):
    """BlockSpec for grid-invariant operands (weights / biases / LN params)."""
    zeros = (0,) * len(shape)
    imap = (lambda b, s: zeros) if grid_rank == 2 else (lambda b, q, k: zeros)
    if single_buffer:
        # Fetched exactly once across the whole grid -> one VMEM buffer.
        return pl.BlockSpec(shape, imap, pipeline_mode=pl.Buffered(1))
    return pl.BlockSpec(shape, imap)


# ----------------------------- kernels --------------------------------------

def embed_kv_kernel(x_ref, w_in_ref, b_in_ref, pos_ref, wkv_ref, bkv_ref,
                    h_ref, kv_ref):
    """h = x @ W_in + b_in + pos ;  kv = h @ W_kv(layer 0) + b_kv(layer 0)."""
    x = x_ref[0]                                                  # (ts, Din) bf16
    h = jnp.dot(x, w_in_ref[...], preferred_element_type=jnp.float32)
    h = h + b_in_ref[...] + pos_ref[...]                          # f32
    h_ref[0] = h.astype(h_ref.dtype)
    kv = jnp.dot(h.astype(jnp.bfloat16), wkv_ref[...],
                 preferred_element_type=jnp.float32) + bkv_ref[...]
    kv_ref[0] = kv.astype(kv_ref.dtype)


def kv_proj_kernel(h_ref, wkv_ref, bkv_ref, kv_ref):
    """kv = h @ W_kv + b_kv -- full sequence, computed ONCE per layer."""
    kv = jnp.dot(h_ref[0], wkv_ref[...],
                 preferred_element_type=jnp.float32) + bkv_ref[...]
    kv_ref[0] = kv.astype(kv_ref.dtype)


def layer_kernel(xq_ref, kv_ref,
                 wq_ref, bq_ref, wo_ref, bo_ref,
                 w1_ref, b1_ref, w2_ref, b2_ref,
                 g1_ref, be1_ref, g2_ref, be2_ref,
                 o_ref,
                 q_scr, m_scr, l_scr, acc_scr,
                 *, n_heads):
    """Flash-style attention + FFN for one (batch, q-tile) block.

    Grid = (B, n_q, n_k); k (K/V stream) is the innermost, 'arbitrary' axis.
    xq_ref : (1, tq, D)   query / residual rows (constant across k)
    kv_ref : (1, tk, 2D)  K|V block of this k step (precomputed, bf16)
    """
    tq, D = xq_ref.shape[1], xq_ref.shape[2]
    tk = kv_ref.shape[1]
    dh = D // n_heads
    k_idx = pl.program_id(2)

    # ---- prologue (once per q tile): Q projection, head-major, pre-scaled ----
    @pl.when(k_idx == 0)
    def _prologue():
        q = jnp.dot(xq_ref[0], wq_ref[...],
                    preferred_element_type=jnp.float32) + bq_ref[...]   # (tq, D)
        q = q * (1.0 / math.sqrt(dh))           # fold softmax scale into Q once
        q_scr[...] = jnp.transpose(q.reshape(tq, n_heads, dh),
                                   (1, 0, 2)).astype(q_scr.dtype)       # (H,tq,dh)
        m_scr[...] = jnp.full(m_scr.shape, -jnp.inf, m_scr.dtype)
        l_scr[...] = jnp.zeros(l_scr.shape, l_scr.dtype)
        acc_scr[...] = jnp.zeros(acc_scr.shape, acc_scr.dtype)

    # ---- online-softmax update for this K/V block ----------------------------
    kv = kv_ref[0]                                               # (tk, 2D) bf16
    kh = jnp.transpose(kv[:, :D].reshape(tk, n_heads, dh), (1, 0, 2))  # (H,tk,dh)
    vh = jnp.transpose(kv[:, D:].reshape(tk, n_heads, dh), (1, 0, 2))  # (H,tk,dh)

    s = jnp.einsum("hqd,hkd->hqk", q_scr[...], kh,
                   preferred_element_type=jnp.float32)           # (H, tq, tk) f32
    m_prev = m_scr[...]
    m_new = jnp.maximum(m_prev, jnp.max(s, axis=-1, keepdims=True))
    alpha = jnp.exp(m_prev - m_new)
    p = jnp.exp(s - m_new)
    l_scr[...] = alpha * l_scr[...] + jnp.sum(p, axis=-1, keepdims=True)
    acc_scr[...] = alpha * acc_scr[...] + jnp.einsum(
        "hqk,hkd->hqd", p.astype(jnp.bfloat16), vh,
        preferred_element_type=jnp.float32)
    m_scr[...] = m_new

    # ---- epilogue (last K/V block): output proj, residual+LN, FFN, LN --------
    @pl.when(k_idx == pl.num_programs(2) - 1)
    def _epilogue():
        ctx = acc_scr[...] * pl.reciprocal(l_scr[...], approx=True)     # (H,tq,dh)
        ctx = jnp.transpose(ctx, (1, 0, 2)).reshape(tq, D)              # (tq, D)
        attn = jnp.dot(ctx.astype(jnp.bfloat16), wo_ref[...],
                       preferred_element_type=jnp.float32) + bo_ref[...]
        h1 = _layernorm(xq_ref[0].astype(jnp.float32) + attn,
                        g1_ref[...], be1_ref[...])
        f = jnp.dot(h1.astype(jnp.bfloat16), w1_ref[...],
                    preferred_element_type=jnp.float32) + b1_ref[...]
        f = jnp.maximum(f, 0.0)
        f = jnp.dot(f.astype(jnp.bfloat16), w2_ref[...],
                    preferred_element_type=jnp.float32) + b2_ref[...]
        o_ref[0] = _layernorm(h1 + f, g2_ref[...], be2_ref[...]).astype(o_ref.dtype)


# ----------------------------- parameters -----------------------------------

def xavier_uniform(key, fan_in, fan_out):
    bound = math.sqrt(6.0 / (fan_in + fan_out))
    return jax.random.uniform(key, (fan_in, fan_out), jnp.float32, -bound, bound)


def init_params(key, input_dim, d_model, d_ff, n_layers, max_seq_len):
    keys = jax.random.split(key, 2 + 6 * n_layers)
    params = {
        # matmul weights stored bf16 (halves DMA, feeds the MXU at bf16 rate);
        # biases / LN params / positional embedding stay f32 (VPU math).
        "w_in": xavier_uniform(keys[0], input_dim, d_model).astype(jnp.bfloat16),
        "b_in": jnp.zeros((1, d_model), jnp.float32),
        "pos": xavier_uniform(keys[1], max_seq_len, d_model),   # learnable pos-emb
        "layers": [],
    }
    for li in range(n_layers):
        k = keys[2 + 6 * li: 2 + 6 * (li + 1)]
        wk = xavier_uniform(k[1], d_model, d_model)
        wv = xavier_uniform(k[2], d_model, d_model)
        params["layers"].append({
            "wq": xavier_uniform(k[0], d_model, d_model).astype(jnp.bfloat16),
            "wkv": jnp.concatenate([wk, wv], axis=1).astype(jnp.bfloat16),
            "wo": xavier_uniform(k[3], d_model, d_model).astype(jnp.bfloat16),
            "w1": xavier_uniform(k[4], d_model, d_ff).astype(jnp.bfloat16),
            "w2": xavier_uniform(k[5], d_ff, d_model).astype(jnp.bfloat16),
            "bq": jnp.zeros((1, d_model), jnp.float32),
            "bkv": jnp.zeros((1, 2 * d_model), jnp.float32),
            "bo": jnp.zeros((1, d_model), jnp.float32),
            "b1": jnp.zeros((1, d_ff), jnp.float32),
            "b2": jnp.zeros((1, d_model), jnp.float32),
            "g1": jnp.ones((1, d_model), jnp.float32),
            "be1": jnp.zeros((1, d_model), jnp.float32),
            "g2": jnp.ones((1, d_model), jnp.float32),
            "be2": jnp.zeros((1, d_model), jnp.float32),
        })
    return params


# ----------------------------- wrapper --------------------------------------

def fourier_transformer_forward(x, params, *, n_heads, seq_tile=None,
                                single_buffer_weights=True):
    B, S, Din = x.shape
    D = params["w_in"].shape[1]
    F = params["layers"][0]["w1"].shape[1]
    H = n_heads
    dh = D // H
    tile = seq_tile or _choose_seq_tile(S)
    assert S % tile == 0, "seq tile must divide sequence length"
    n_s = S // tile
    tq = tk = tile
    n_q = n_k = n_s

    act_dtype = jnp.bfloat16               # inter-layer activations stored bf16
    x = x.astype(jnp.bfloat16)             # halves input DMA; matmuls are bf16
    pos = params["pos"][:S, :]

    csp2 = lambda shape: _const_spec(shape, 2, single_buffer_weights)
    csp3 = lambda shape: _const_spec(shape, 3, single_buffer_weights)

    # VMEM budget estimate for the attention kernel (largest per-step footprint)
    est = (2 * (2 * D * D + 2 * D * F)                    # bf16 weights (x1)
           + 4 * (7 * D + F)                              # f32 biases / LN params
           + 2 * 2 * (tq * D + tk * 2 * D + tq * D)       # dbl-buffered act blocks
           + 2 * H * tq * dh + 4 * H * tq * (dh + 2)      # scratch
           + 4 * (2 * H * tq * tk + tq * F + 4 * tq * D)) # live temporaries
    vmem_limit = _vmem_limit_bytes(est)

    # "parallel" only pays off on v7x (2 TCs share the grid); harmless elsewhere.
    cparams3 = pltpu.CompilerParams(
        dimension_semantics=("parallel", "parallel", "arbitrary"),
        vmem_limit_bytes=vmem_limit)
    cparams2 = pltpu.CompilerParams(
        dimension_semantics=("parallel", "parallel"),
        vmem_limit_bytes=vmem_limit)

    # ---- layer 0: input projection + positional add + K/V projection (fused) --
    lp0 = params["layers"][0]
    embed_cost = pl.CostEstimate(
        flops=int(2 * B * S * Din * D + 4 * B * S * D * D),
        transcendentals=0,
        bytes_accessed=int(2 * B * S * Din + 2 * (Din * D + 2 * D * D)
                           + 4 * S * D + 2 * B * S * D + 4 * B * S * D))
    h, kv = pl.pallas_call(
        embed_kv_kernel,
        out_shape=(jax.ShapeDtypeStruct((B, S, D), act_dtype),
                   jax.ShapeDtypeStruct((B, S, 2 * D), act_dtype)),
        grid=(B, n_s),
        in_specs=[
            pl.BlockSpec((1, tile, Din), lambda b, s: (b, s, 0)),
            csp2((Din, D)),                                   # w_in
            csp2((1, D)),                                     # b_in
            pl.BlockSpec((tile, D), lambda b, s: (s, 0)),     # pos
            csp2((D, 2 * D)),                                 # wkv (layer 0)
            csp2((1, 2 * D)),                                 # bkv (layer 0)
        ],
        out_specs=(pl.BlockSpec((1, tile, D), lambda b, s: (b, s, 0)),
                   pl.BlockSpec((1, tile, 2 * D), lambda b, s: (b, s, 0))),
        compiler_params=cparams2,
        cost_estimate=embed_cost,
    )(x, params["w_in"], params["b_in"], pos, lp0["wkv"], lp0["bkv"])

    # ---- per-layer K/V projection (layers >= 1): hoisted out of the q-tile grid
    kv_proj = pl.pallas_call(
        kv_proj_kernel,
        out_shape=jax.ShapeDtypeStruct((B, S, 2 * D), act_dtype),
        grid=(B, n_s),
        in_specs=[pl.BlockSpec((1, tile, D), lambda b, s: (b, s, 0)),
                  csp2((D, 2 * D)),
                  csp2((1, 2 * D))],
        out_specs=pl.BlockSpec((1, tile, 2 * D), lambda b, s: (b, s, 0)),
        compiler_params=cparams2,
        cost_estimate=pl.CostEstimate(
            flops=int(4 * B * S * D * D), transcendentals=0,
            bytes_accessed=int(2 * B * S * D + 4 * D * D + 4 * B * S * D)),
    )

    # ---- attention + FFN, flash-style K/V streaming ----------------------------
    layer_cost = pl.CostEstimate(
        flops=int(4 * B * S * D * D + 4 * B * S * S * D + 4 * B * S * D * F),
        transcendentals=int(B * H * S * S + 2 * B * S * D),
        bytes_accessed=int(2 * B * S * D                    # q / residual tiles
                           + 4 * B * S * D * n_q            # K/V re-read per q tile
                           + 2 * (2 * D * D + 2 * D * F)    # weights, once
                           + 2 * B * S * D))                # output
    layer_fn = pl.pallas_call(
        functools.partial(layer_kernel, n_heads=n_heads),
        out_shape=jax.ShapeDtypeStruct((B, S, D), act_dtype),
        grid=(B, n_q, n_k),
        in_specs=[
            pl.BlockSpec((1, tq, D), lambda b, q, k: (b, q, 0)),       # x q-rows
            pl.BlockSpec((1, tk, 2 * D), lambda b, q, k: (b, k, 0)),   # K/V stream
            csp3((D, D)), csp3((1, D)),          # wq, bq
            csp3((D, D)), csp3((1, D)),          # wo, bo
            csp3((D, F)), csp3((1, F)),          # w1, b1
            csp3((F, D)), csp3((1, D)),          # w2, b2
            csp3((1, D)), csp3((1, D)),          # g1, be1
            csp3((1, D)), csp3((1, D)),          # g2, be2
        ],
        out_specs=pl.BlockSpec((1, tq, D), lambda b, q, k: (b, q, 0)),
        scratch_shapes=[
            pltpu.VMEM((H, tq, dh), jnp.bfloat16),   # Q (head-major, pre-scaled)
            pltpu.VMEM((H, tq, 1), jnp.float32),     # running max
            pltpu.VMEM((H, tq, 1), jnp.float32),     # running denom
            pltpu.VMEM((H, tq, dh), jnp.float32),    # running numerator
        ],
        compiler_params=cparams3,
        cost_estimate=layer_cost,
    )

    for li, lp in enumerate(params["layers"]):
        if li > 0:
            kv = kv_proj(h, lp["wkv"], lp["bkv"])
        h = layer_fn(h, kv,
                     lp["wq"], lp["bq"], lp["wo"], lp["bo"],
                     lp["w1"], lp["b1"], lp["w2"], lp["b2"],
                     lp["g1"], lp["be1"], lp["g2"], lp["be2"])
    # output_dropout / layerdrop are identity in eval mode
    return h


# ----------------------------- pure-JAX reference ----------------------------

def reference_forward(x, params, *, n_heads):
    D = params["w_in"].shape[1]
    B, S, _ = x.shape
    dh = D // n_heads
    h = x @ params["w_in"].astype(jnp.float32) + params["b_in"]
    h = h + params["pos"][:S][None]
    for lp in params["layers"]:
        q = h @ lp["wq"].astype(jnp.float32) + lp["bq"]
        kv = h @ lp["wkv"].astype(jnp.float32) + lp["bkv"]
        k, v = kv[..., :D], kv[..., D:]
        qh = q.reshape(B, S, n_heads, dh)
        kh = k.reshape(B, S, n_heads, dh)
        vh = v.reshape(B, S, n_heads, dh)
        s = jnp.einsum("bqhd,bkhd->bhqk", qh, kh) / math.sqrt(dh)
        p = jax.nn.softmax(s, axis=-1)
        ctx = jnp.einsum("bhqk,bkhd->bqhd", p, vh).reshape(B, S, D)
        attn = ctx @ lp["wo"].astype(jnp.float32) + lp["bo"]
        h1 = _layernorm(h + attn, lp["g1"], lp["be1"])
        f = jnp.maximum(h1 @ lp["w1"].astype(jnp.float32) + lp["b1"], 0.0)
        f = f @ lp["w2"].astype(jnp.float32) + lp["b2"]
        h = _layernorm(h1 + f, lp["g2"], lp["be2"])
    return h


# ----------------------------- main -----------------------------------------

if __name__ == "__main__":
    # small shapes consistent with the module (d_model / d_ff lane-dense);
    # seq=512 so the default (>=128) tile gives a real (B, n_q, n_k) grid.
    batch, seq, input_dim = 2, 512, 16
    d_model, n_heads, n_layers, d_ff = 128, 4, 2, 256
    max_seq_len = 512

    key = jax.random.PRNGKey(0)
    k_x, k_p = jax.random.split(key)

    x = jax.random.normal(k_x, (batch, seq, input_dim), jnp.float32)
    params = init_params(k_p, input_dim, d_model, d_ff, n_layers, max_seq_len)

    fwd = functools.partial(fourier_transformer_forward, n_heads=n_heads)
    try:
        out = jax.block_until_ready(fwd(x, params))
    except Exception:
        # TODO(synk): this JAX build rejected pipeline_mode=pl.Buffered(1) on
        # constant-index BlockSpecs; retry with default double-buffering.
        out = jax.block_until_ready(fwd(x, params, single_buffer_weights=False))

    ref = reference_forward(x, params, n_heads=n_heads)
    out_f32 = out.astype(jnp.float32)
    err = float(jnp.max(jnp.abs(out_f32 - ref)))

    assert out.shape == (batch, seq, d_model)
    assert bool(jnp.all(jnp.isfinite(out_f32)))
    assert err < 0.2, f"kernel vs reference max abs err too large: {err}"
    print("KERNEL_OK")
</pallas_src>

<mosaic_0001>
module attributes {stable_mosaic.version = 11 : i64} {
  func.func @embed_kv_kernel(%arg0: i32, %arg1: i32, %arg2: memref<1x256x16xbf16, #tpu.memory_space<vmem>>, %arg3: memref<16x128xbf16, #tpu.memory_space<vmem>>, %arg4: memref<1x128xf32, #tpu.memory_space<vmem>>, %arg5: memref<256x128xf32, #tpu.memory_space<vmem>>, %arg6: memref<128x256xbf16, #tpu.memory_space<vmem>>, %arg7: memref<1x256xf32, #tpu.memory_space<vmem>>, %arg8: memref<1x256x128xbf16, #tpu.memory_space<vmem>>, %arg9: memref<1x256x256xbf16, #tpu.memory_space<vmem>>) attributes {dimension_semantics = [#tpu.dimension_semantics<parallel>, #tpu.dimension_semantics<parallel>], iteration_bounds = array<i64: 2, 2>, scalar_prefetch = 0 : i64, scratch_operands = 0 : i64, tpu.core_type = #tpu.core_type<tc>, window_params = [{transform_indices = @transform_0, window_bounds = array<i64: 1, 256, 16>}, {pipeline_mode = #tpu.pipeline_mode<synchronous>, transform_indices = @transform_1, window_bounds = array<i64: 16, 128>}, {pipeline_mode = #tpu.pipeline_mode<synchronous>, transform_indices = @transform_2, window_bounds = array<i64: 1, 128>}, {transform_indices = @transform_3, window_bounds = array<i64: 256, 128>}, {pipeline_mode = #tpu.pipeline_mode<synchronous>, transform_indices = @transform_4, window_bounds = array<i64: 128, 256>}, {pipeline_mode = #tpu.pipeline_mode<synchronous>, transform_indices = @transform_5, window_bounds = array<i64: 1, 256>}, {transform_indices = @transform_6, window_bounds = array<i64: 1, 256, 128>}, {transform_indices = @transform_7, window_bounds = array<i64: 1, 256, 256>}]} {
    %c0 = arith.constant 0 : index
    %c0_0 = arith.constant 0 : index
    %c0_1 = arith.constant 0 : index
    %0 = vector.load %arg2[%c0, %c0_0, %c0_1] : memref<1x256x16xbf16, #tpu.memory_space<vmem>>, vector<1x256x16xbf16>
    %1 = vector.shape_cast %0 : vector<1x256x16xbf16> to vector<256x16xbf16>
    %c0_2 = arith.constant 0 : index
    %c0_3 = arith.constant 0 : index
    %2 = vector.load %arg3[%c0_2, %c0_3] : memref<16x128xbf16, #tpu.memory_space<vmem>>, vector<16x128xbf16>
    %cst = arith.constant dense<0.000000e+00> : vector<256x128xf32>
    %3 = tpu.matmul %1, %2, %cst {dimension_numbers = #tpu.dot_dimension_numbers<[1], [0], [0], [1], [0, 0, 1, 1], [], []>} : vector<256x16xbf16>, vector<16x128xbf16>, vector<256x128xf32> -> vector<256x128xf32>
    %c0_4 = arith.constant 0 : index
    %c0_5 = arith.constant 0 : index
    %4 = vector.load %arg4[%c0_4, %c0_5] : memref<1x128xf32, #tpu.memory_space<vmem>>, vector<1x128xf32>
    %5 = vector.broadcast %4 : vector<1x128xf32> to vector<256x128xf32>
    %6 = arith.addf %3, %5 : vector<256x128xf32>
    %c0_6 = arith.constant 0 : index
    %c0_7 = arith.constant 0 : index
    %7 = vector.load %arg5[%c0_6, %c0_7] : memref<256x128xf32, #tpu.memory_space<vmem>>, vector<256x128xf32>
    %8 = arith.addf %6, %7 : vector<256x128xf32>
    %9 = arith.truncf %8 : vector<256x128xf32> to vector<256x128xbf16>
    %c0_8 = arith.constant 0 : index
    %c0_9 = arith.constant 0 : index
    %c0_10 = arith.constant 0 : index
    %10 = vector.load %arg8[%c0_8, %c0_9, %c0_10] : memref<1x256x128xbf16, #tpu.memory_space<vmem>>, vector<1x256x128xbf16>
    %11 = vector.shape_cast %10 : vector<1x256x128xbf16> to vector<256x128xbf16>
    %12 = vector.shape_cast %9 : vector<256x128xbf16> to vector<1x256x128xbf16>
    tpu.vector_store %arg8[%c0_8, %c0_9, %c0_10], %12 {strides = array<i32>} : memref<1x256x128xbf16, #tpu.memory_space<vmem>>, vector<1x256x128xbf16>,
    %13 = arith.truncf %8 : vector<256x128xf32> to vector<256x128xbf16>
    %c0_11 = arith.constant 0 : index
    %c0_12 = arith.constant 0 : index
    %14 = vector.load %arg6[%c0_11, %c0_12] : memref<128x256xbf16, #tpu.memory_space<vmem>>, vector<128x256xbf16>
    %cst_13 = arith.constant dense<0.000000e+00> : vector<256x256xf32>
    %15 = tpu.matmul %13, %14, %cst_13 {dimension_numbers = #tpu.dot_dimension_numbers<[1], [0], [0], [1], [0, 0, 1, 1], [], []>} : vector<256x128xbf16>, vector<128x256xbf16>, vector<256x256xf32> -> vector<256x256xf32>
    %c0_14 = arith.constant 0 : index
    %c0_15 = arith.constant 0 : index
    %16 = vector.load %arg7[%c0_14, %c0_15] : memref<1x256xf32, #tpu.memory_space<vmem>>, vector<1x256xf32>
    %17 = vector.broadcast %16 : vector<1x256xf32> to vector<256x256xf32>
    %18 = arith.addf %15, %17 : vector<256x256xf32>
    %19 = arith.truncf %18 : vector<256x256xf32> to vector<256x256xbf16>
    %c0_16 = arith.constant 0 : index
    %c0_17 = arith.constant 0 : index
    %c0_18 = arith.constant 0 : index
    %20 = vector.load %arg9[%c0_16, %c0_17, %c0_18] : memref<1x256x256xbf16, #tpu.memory_space<vmem>>, vector<1x256x256xbf16>
    %21 = vector.shape_cast %20 : vector<1x256x256xbf16> to vector<256x256xbf16>
    %22 = vector.shape_cast %19 : vector<256x256xbf16> to vector<1x256x256xbf16>
    tpu.vector_store %arg9[%c0_16, %c0_17, %c0_18], %22 {strides = array<i32>} : memref<1x256x256xbf16, #tpu.memory_space<vmem>>, vector<1x256x256xbf16>,
    return
  }
  func.func @transform_0(%arg0: i32, %arg1: i32) -> (i32, i32, i32) {
    %c0_i32 = arith.constant 0 : i32
    %c0_i32_0 = arith.constant 0 : i32
    return %arg0, %arg1, %c0_i32 : i32, i32, i32
  }
  func.func @transform_1(%arg0: i32, %arg1: i32) -> (i32, i32) {
    %c0_i32 = arith.constant 0 : i32
    %c0_i32_0 = arith.constant 0 : i32
    %c0_i32_1 = arith.constant 0 : i32
    return %c0_i32, %c0_i32_0 : i32, i32
  }
  func.func @transform_2(%arg0: i32, %arg1: i32) -> (i32, i32) {
    %c0_i32 = arith.constant 0 : i32
    %c0_i32_0 = arith.constant 0 : i32
    %c0_i32_1 = arith.constant 0 : i32
    return %c0_i32, %c0_i32_0 : i32, i32
  }
  func.func @transform_3(%arg0: i32, %arg1: i32) -> (i32, i32) {
    %c0_i32 = arith.constant 0 : i32
    %c0_i32_0 = arith.constant 0 : i32
    return %arg1, %c0_i32 : i32, i32
  }
  func.func @transform_4(%arg0: i32, %arg1: i32) -> (i32, i32) {
    %c0_i32 = arith.constant 0 : i32
    %c0_i32_0 = arith.constant 0 : i32
    %c0_i32_1 = arith.constant 0 : i32
    return %c0_i32, %c0_i32_0 : i32, i32
  }
  func.func @transform_5(%arg0: i32, %arg1: i32) -> (i32, i32) {
    %c0_i32 = arith.constant 0 : i32
    %c0_i32_0 = arith.constant 0 : i32
    %c0_i32_1 = arith.constant 0 : i32
    return %c0_i32, %c0_i32_0 : i32, i32
  }
  func.func @transform_6(%arg0: i32, %arg1: i32) -> (i32, i32, i32) {
    %c0_i32 = arith.constant 0 : i32
    %c0_i32_0 = arith.constant 0 : i32
    return %arg0, %arg1, %c0_i32 : i32, i32, i32
  }
  func.func @transform_7(%arg0: i32, %arg1: i32) -> (i32, i32, i32) {
    %c0_i32 = arith.constant 0 : i32
    %c0_i32_0 = arith.constant 0 : i32
    return %arg0, %arg1, %c0_i32 : i32, i32, i32
  }
}

module attributes {stable_mosaic.version = 11 : i64} {
  func.func @embed_kv_kernel(%arg0: i32, %arg1: i32, %arg2: memref<1x256x16xbf16, #tpu.memory_space<vmem>>, %arg3: memref<16x128xbf16, #tpu.memory_space<vmem>>, %arg4: memref<1x128xf32, #tpu.memory_space<vmem>>, %arg5: memref<256x128xf32, #tpu.memory_space<vmem>>, %arg6: memref<128x256xbf16, #tpu.memory_space<vmem>>, %arg7: memref<1x256xf32, #tpu.memory_space<vmem>>, %arg8: memref<1x256x128xbf16, #tpu.memory_space<vmem>>, %arg9: memref<1x256x256xbf16, #tpu.memory_space<vmem>>) attributes {dimension_semantics = [#tpu.dimension_semantics<parallel>, #tpu.dimension_semantics<parallel>], iteration_bounds = array<i64: 2, 2>, scalar_prefetch = 0 : i64, scratch_operands = 0 : i64, tpu.core_type = #tpu.core_type<tc>, window_params = [{transform_indices = @transform_0, window_bounds = array<i64: 1, 256, 16>}, {pipeline_mode = #tpu.pipeline_mode<synchronous>, transform_indices = @transform_1, window_bounds = array<i64: 16, 128>}, {pipeline_mode = #tpu.pipeline_mode<synchronous>, transform_indices = @transform_2, window_bounds = array<i64: 1, 128>}, {transform_indices = @transform_3, window_bounds = array<i64: 256, 128>}, {pipeline_mode = #tpu.pipeline_mode<synchronous>, transform_indices = @transform_4, window_bounds = array<i64: 128, 256>}, {pipeline_mode = #tpu.pipeline_mode<synchronous>, transform_indices = @transform_5, window_bounds = array<i64: 1, 256>}, {transform_indices = @transform_6, window_bounds = array<i64: 1, 256, 128>}, {transform_indices = @transform_7, window_bounds = array<i64: 1, 256, 256>}]} {
    %c0 = arith.constant 0 : index
    %c0_0 = arith.constant 0 : index
    %c0_1 = arith.constant 0 : index
    %0 = vector.load %arg2[%c0, %c0_0, %c0_1] : memref<1x256x16xbf16, #tpu.memory_space<vmem>>, vector<1x256x16xbf16>
    %1 = vector.shape_cast %0 : vector<1x256x16xbf16> to vector<256x16xbf16>
    %c0_2 = arith.constant 0 : index
    %c0_3 = arith.constant 0 : index
    %2 = vector.load %arg3[%c0_2, %c0_3] : memref<16x128xbf16, #tpu.memory_space<vmem>>, vector<16x128xbf16>
    %cst = arith.constant dense<0.000000e+00> : vector<256x128xf32>
    %3 = tpu.matmul %1, %2, %cst {dimension_numbers = #tpu.dot_dimension_numbers<[1], [0], [0], [1], [0, 0, 1, 1], [], []>} : vector<256x16xbf16>, vector<16x128xbf16>, vector<256x128xf32> -> vector<256x128xf32>
    %c0_4 = arith.constant 0 : index
    %c0_5 = arith.constant 0 : index
    %4 = vector.load %arg4[%c0_4, %c0_5] : memref<1x128xf32, #tpu.memory_space<vmem>>, vector<1x128xf32>
    %5 = vector.broadcast %4 : vector<1x128xf32> to vector<256x128xf32>
    %6 = arith.addf %3, %5 : vector<256x128xf32>
    %c0_6 = arith.constant 0 : index
    %c0_7 = arith.constant 0 : index
    %7 = vector.load %arg5[%c0_6, %c0_7] : memref<256x128xf32, #tpu.memory_space<vmem>>, vector<256x128xf32>
    %8 = arith.addf %6, %7 : vector<256x128xf32>
    %9 = arith.truncf %8 : vector<256x128xf32> to vector<256x128xbf16>
    %c0_8 = arith.constant 0 : index
    %c0_9 = arith.constant 0 : index
    %c0_10 = arith.constant 0 : index
    %10 = vector.load %arg8[%c0_8, %c0_9, %c0_10] : memref<1x256x128xbf16, #tpu.memory_space<vmem>>, vector<1x256x128xbf16>
    %11 = vector.shape_cast %10 : vector<1x256x128xbf16> to vector<256x128xbf16>
    %12 = vector.shape_cast %9 : vector<256x128xbf16> to vector<1x256x128xbf16>
    tpu.vector_store %arg8[%c0_8, %c0_9, %c0_10], %12 {strides = array<i32>} : memref<1x256x128xbf16, #tpu.memory_space<vmem>>, vector<1x256x128xbf16>,
    %13 = arith.truncf %8 : vector<256x128xf32> to vector<256x128xbf16>
    %c0_11 = arith.constant 0 : index
    %c0_12 = arith.constant 0 : index
    %14 = vector.load %arg6[%c0_11, %c0_12] : memref<128x256xbf16, #tpu.memory_space<vmem>>, vector<128x256xbf16>
    %cst_13 = arith.constant dense<0.000000e+00> : vector<256x256xf32>
    %15 = tpu.matmul %13, %14, %cst_13 {dimension_numbers = #tpu.dot_dimension_numbers<[1], [0], [0], [1], [0, 0, 1, 1], [], []>} : vector<256x128xbf16>, vector<128x256xbf16>, vector<256x256xf32> -> vector<256x256xf32>
    %c0_14 = arith.constant 0 : index
    %c0_15 = arith.constant 0 : index
    %16 = vector.load %arg7[%c0_14, %c0_15] : memref<1x256xf32, #tpu.memory_space<vmem>>, vector<1x256xf32>
    %17 = vector.broadcast %16 : vector<1x256xf32> to vector<256x256xf32>
    %18 = arith.addf %15, %17 : vector<256x256xf32>
    %19 = arith.truncf %18 : vector<256x256xf32> to vector<256x256xbf16>
    %c0_16 = arith.constant 0 : index
    %c0_17 = arith.constant 0 : index
    %c0_18 = arith.constant 0 : index
    %20 = vector.load %arg9[%c0_16, %c0_17, %c0_18] : memref<1x256x256xbf16, #tpu.memory_space<vmem>>, vector<1x256x256xbf16>
    %21 = vector.shape_cast %20 : vector<1x256x256xbf16> to vector<256x256xbf16>
    %22 = vector.shape_cast %19 : vector<256x256xbf16> to vector<1x256x256xbf16>
    tpu.vector_store %arg9[%c0_16, %c0_17, %c0_18], %22 {strides = array<i32>} : memref<1x256x256xbf16, #tpu.memory_space<vmem>>, vector<1x256x256xbf16>,
    return
  }
  func.func @transform_0(%arg0: i32, %arg1: i32) -> (i32, i32, i32) {
    %c0_i32 = arith.constant 0 : i32
    %c0_i32_0 = arith.constant 0 : i32
    return %arg0, %arg1, %c0_i32 : i32, i32, i32
  }
  func.func @transform_1(%arg0: i32, %arg1: i32) -> (i32, i32) {
    %c0_i32 = arith.constant 0 : i32
    %c0_i32_0 = arith.constant 0 : i32
    %c0_i32_1 = arith.constant 0 : i32
    return %c0_i32, %c0_i32_0 : i32, i32
  }
  func.func @transform_2(%arg0: i32, %arg1: i32) -> (i32, i32) {
    %c0_i32 = arith.constant 0 : i32
    %c0_i32_0 = arith.constant 0 : i32
    %c0_i32_1 = arith.constant 0 : i32
    return %c0_i32, %c0_i32_0 : i32, i32
  }
  func.func @transform_3(%arg0: i32, %arg1: i32) -> (i32, i32) {
    %c0_i32 = arith.constant 0 : i32
    %c0_i32_0 = arith.constant 0 : i32
    return %arg1, %c0_i32 : i32, i32
  }
  func.func @transform_4(%arg0: i32, %arg1: i32) -> (i32, i32) {
    %c0_i32 = arith.constant 0 : i32
    %c0_i32_0 = arith.constant 0 : i32
    %c0_i32_1 = arith.constant 0 : i32
    return %c0_i32, %c0_i32_0 : i32, i32
  }
  func.func @transform_5(%arg0: i32, %arg1: i32) -> (i32, i32) {
    %c0_i32 = arith.constant 0 : i32
    %c0_i32_0 = arith.constant 0 : i32
    %c0_i32_1 = arith.constant 0 : i32
    return %c0_i32, %c0_i32_0 : i32, i32
  }
  func.func @transform_6(%arg0: i32, %arg1: i32) -> (i32, i32, i32) {
    %c0_i32 = arith.constant 0 : i32
    %c0_i32_0 = arith.constant 0 : i32
    return %arg0, %arg1, %c0_i32 : i32, i32, i32
  }
  func.func @transform_7(%arg0: i32, %arg1: i32) -> (i32, i32, i32) {
    %c0_i32 = arith.constant 0 : i32
    %c0_i32_0 = arith.constant 0 : i32
    return %arg0, %arg1, %c0_i32 : i32, i32, i32
  }
}

</mosaic_0001>

<llo_original>
// kernel: tpu_custom_call.1
$region0: #{tpu_custom_call.1}
  #allocation0 [shape = 'u32[]', space=smem, size = 0x4, offset = 0x4, fixed_abs, tag = 'smem constant byte address 0x4 - core index']
  #allocation1 [shape = 'u32[144,128]{1,0:T(1,128)}', space=vmem, size = 0x12000, scoped, tag = 'internal scratch']
  %s0 = inlined_call_operand.vmem [shape: bf16[2,512,16], index: 0, kind: input, shape index: {}]
  %s1 = inlined_call_operand.vmem [shape: bf16[16,128], index: 1, kind: input, shape index: {}]
  %s2 = inlined_call_operand.vmem [shape: f32[1,128], index: 2, kind: input, shape index: {}]
  %s3 = inlined_call_operand.vmem [shape: f32[512,128], index: 3, kind: input, shape index: {}]
  %s4 = inlined_call_operand.hbm [shape: bf16[128,256], index: 4, kind: input, shape index: {}]
  %s5 = inlined_call_operand.vmem [shape: f32[1,256], index: 5, kind: input, shape index: {}]
  %s6 = inlined_call_operand.hbm [shape: bf16[2,512,128], index: 6, kind: output, shape index: {0}]
  %s7 = inlined_call_operand.hbm [shape: bf16[2,512,256], index: 7, kind: output, shape index: {1}]
  %8 = xla_tuple %s6, %s7
  %s9 = sld [smem:[#allocation0]]
  $region69: #{tpu_custom_call.1} parent=0
    _
  %s11 = ssub.s32 1, %s9
  %s12 = scalar_select 0, %s11, %s9
  $region1: #{tpu_custom_call.1} parent=0
    #allocation2 [shape = 'u8[65536]{0}', space=vmem, size = 0x10000, scoped, tag = 'input window, operand 4, single buffered']
    #allocation3 [shape = 's32[2]{0}', space=sflag, size = 0x8, scoped, tag = 'scoped memory for tpu_custom_call.1']
    #allocation4 [shape = 's32[2]{0}', space=sflag, size = 0x8, scoped, tag = 'scoped memory for tpu_custom_call.1']
    #allocation5 [shape = 'u8[131072]{0}', space=vmem, size = 0x20000, scoped, tag = 'output window, operand 0']
    #allocation6 [shape = 'u8[262144]{0}', space=vmem, size = 0x40000, scoped, tag = 'output window, operand 1']
    #allocation7 [shape = 's32[2]{0}', space=sflag, size = 0x8, scoped, tag = 'scoped memory for tpu_custom_call.1']
    %13 = vsyncpa [#allocation3], 0
    %14 = vsyncpa [#allocation4], 0
    %s15 = scalar_lea.sflag [#allocation4], 1
    %16 = vsyncpa %s15, 0
    %17 = vsyncpa [#allocation7], 0
    %s18 = scalar_lea.sflag [#allocation7], 1
    %19 = vsyncpa %s18, 0
    loop: start=0, step=1, limit=6
    $region2: #{tpu_custom_call.1} parent=1 // loop_pre_header
      _
    $region3: #{tpu_custom_call.1} parent=1 // loop_header
      %s21 = sphi 0, %s25
      %p22 = scmp.ge.s32.totalorder %s21, 6
      %s28 = sphi 0, %s40
      %s29 = sphi 0, %s36
      %s30 = sphi 0, %s28
      %s31 = sphi 0, %s29
      %s32 = sphi 0, %s30
      %s33 = sphi 0, %s31
      %s45 = sphi 0, %s47
      %s48 = sphi 0, %s45
      %s49 = sphi 0, %s48
      %s65 = sphi 0, %s49
      %s69 = sphi 0, %s69
      %s71 = sphi 0, %s69
      %s72 = sphi 0, %s71
      %s86 = sphi 0, %s72
      %s90 = sphi 0, %s90
      %s92 = sphi 0, %s90
      %s93 = sphi 0, %s92
      %s107 = sphi 0, %s93
      %s113 = sphi 0, %s115
      %s116 = sphi 0, %s113
      %s117 = sphi 0, %s116
      %s133 = sphi 0, %s117
      %s137 = sphi 0, %s137
      %s139 = sphi 0, %s137
      %s140 = sphi 0, %s139
      %s154 = sphi 0, %s140
      %s158 = sphi 0, %s158
      %s160 = sphi 0, %s158
      %s161 = sphi 0, %s160
      %s175 = sphi 0, %s161
      %s183 = sphi 0, %s185
      %s186 = sphi 0, %s183
      %s187 = sphi 0, %s186
      %s203 = sphi 0, %s187
      %s211 = sphi 0, %s213
      %s214 = sphi 0, %s211
      %s215 = sphi 0, %s214
      %s231 = sphi 0, %s215
    $region4: #{tpu_custom_call.1} parent=1 // loop_header_branch
      %24 = sbr.rel (%p22) target = $region8
    $region5: #{tpu_custom_call.1} parent=1 // loop_body
      %s26 = ssub.s32 %s21, 1
      %s27 = ssub.s32 %s21, 2
      %s34 = sadd.s32 1, %s29
      %p35 = scmp.ge.s32.totalorder %s34, 2
      %s36 = scalar_select %p35, 0, %s34
      %s37 = sadd.s32 1, %s28
      %s38 = scalar_select %p35, %s37, %s28
      %p39 = scmp.ge.s32.totalorder %s38, 2
      %s40 = scalar_select %p39, 0, %s38
      %s41 = ssub.s32 %s28, %s40
      %s42 = ssub.s32 %s29, %s36
      %s43 = sor.u32 %s41, %s42
      %p44 = scmp.eq.s32.totalorder %s43, 0
      %s46 = sadd.s32 %s45, 1
      %s47 = scalar_select %p44, %s45, %s46
      %p50 = pneg %p44
      %p51 = scmp.eq.s32.totalorder %s21, 3
      %p52 = por %p50, %p51
      %p53 = scmp.ne.s32.totalorder %s45, %s48
      %p54 = scmp.eq.s32.totalorder %s21, 0
      %p55 = por %p53, %p54
      %p56 = scmp.ne.s32.totalorder %s45, %s48
      %p57 = scmp.eq.s32.totalorder %s26, 3
      %p58 = por %p56, %p57
      %p59 = scmp.ne.s32.totalorder %s48, %s49
      %p60 = scmp.eq.s32.totalorder %s26, 0
      %p61 = por %p59, %p60
      %p62 = scmp.ne.s32.totalorder %s48, %s49
      %p63 = scmp.eq.s32.totalorder %s27, 3
      %p64 = por %p62, %p63
      %p66 = scmp.ne.s32.totalorder %s49, %s65
      %p67 = scmp.eq.s32.totalorder %s27, 0
      %p68 = por %p66, %p67
      %s70 = sadd.s32 %s69, 1
      %p73 = scmp.eq.s32.totalorder %s21, 3
      %p74 = scmp.ne.s32.totalorder %s69, %s71
      %p75 = scmp.eq.s32.totalorder %s21, 0
      %p76 = por %p74, %p75
      %p77 = scmp.ne.s32.totalorder %s69, %s71
      %p78 = scmp.eq.s32.totalorder %s26, 3
      %p79 = por %p77, %p78
      %p80 = scmp.ne.s32.totalorder %s71, %s72
      %p81 = scmp.eq.s32.totalorder %s26, 0
      %p82 = por %p80, %p81
      %p83 = scmp.ne.s32.totalorder %s71, %s72
      %p84 = scmp.eq.s32.totalorder %s27, 3
      %p85 = por %p83, %p84
      %p87 = scmp.ne.s32.totalorder %s72, %s86
      %p88 = scmp.eq.s32.totalorder %s27, 0
      %p89 = por %p87, %p88
      %s91 = sadd.s32 %s90, 1
      %p94 = scmp.eq.s32.totalorder %s21, 3
      %p95 = scmp.ne.s32.totalorder %s90, %s92
      %p96 = scmp.eq.s32.totalorder %s21, 0
      %p97 = por %p95, %p96
      %p98 = scmp.ne.s32.totalorder %s90, %s92
      %p99 = scmp.eq.s32.totalorder %s26, 3
      %p100 = por %p98, %p99
      %p101 = scmp.ne.s32.totalorder %s92, %s93
      %p102 = scmp.eq.s32.totalorder %s26, 0
      %p103 = por %p101, %p102
      %p104 = scmp.ne.s32.totalorder %s92, %s93
      %p105 = scmp.eq.s32.totalorder %s27, 3
      %p106 = por %p104, %p105
      %p108 = scmp.ne.s32.totalorder %s93, %s107
      %p109 = scmp.eq.s32.totalorder %s27, 0
      %p110 = por %p108, %p109
      %s111 = ssub.s32 %s29, %s36
      %p112 = scmp.eq.s32.totalorder %s111, 0
      %s114 = sadd.s32 %s113, 1
      %s115 = scalar_select %p112, %s113, %s114
      %p118 = pneg %p112
      %p119 = scmp.eq.s32.totalorder %s21, 3
      %p120 = por %p118, %p119
      %p121 = scmp.ne.s32.totalorder %s113, %s116
      %p122 = scmp.eq.s32.totalorder %s21, 0
      %p123 = por %p121, %p122
      %p124 = scmp.ne.s32.totalorder %s113, %s116
      %p125 = scmp.eq.s32.totalorder %s26, 3
      %p126 = por %p124, %p125
      %p127 = scmp.ne.s32.totalorder %s116, %s117
      %p128 = scmp.eq.s32.totalorder %s26, 0
      %p129 = por %p127, %p128
      %p130 = scmp.ne.s32.totalorder %s116, %s117
      %p131 = scmp.eq.s32.totalorder %s27, 3
      %p132 = por %p130, %p131
      %p134 = scmp.ne.s32.totalorder %s117, %s133
      %p135 = scmp.eq.s32.totalorder %s27, 0
      %p136 = por %p134, %p135
      %s138 = sadd.s32 %s137, 1
      %p141 = scmp.eq.s32.totalorder %s21, 3
      %p142 = scmp.ne.s32.totalorder %s137, %s139
      %p143 = scmp.eq.s32.totalorder %s21, 0
      %p144 = por %p142, %p143
      %p145 = scmp.ne.s32.totalorder %s137, %s139
      %p146 = scmp.eq.s32.totalorder %s26, 3
      %p147 = por %p145, %p146
      %p148 = scmp.ne.s32.totalorder %s139, %s140
      %p149 = scmp.eq.s32.totalorder %s26, 0
      %p150 = por %p148, %p149
      %p151 = scmp.ne.s32.totalorder %s139, %s140
      %p152 = scmp.eq.s32.totalorder %s27, 3
      %p153 = por %p151, %p152
      %p155 = scmp.ne.s32.totalorder %s140, %s154
      %p156 = scmp.eq.s32.totalorder %s27, 0
      %p157 = por %p155, %p156
      %s159 = sadd.s32 %s158, 1
      %p162 = scmp.eq.s32.totalorder %s21, 3
      %p163 = scmp.ne.s32.totalorder %s158, %s160
      %p164 = scmp.eq.s32.totalorder %s21, 0
      %p165 = por %p163, %p164
      %p166 = scmp.ne.s32.totalorder %s158, %s160
      %p167 = scmp.eq.s32.totalorder %s26, 3
      %p168 = por %p166, %p167
      %p169 = scmp.ne.s32.totalorder %s160, %s161
      %p170 = scmp.eq.s32.totalorder %s26, 0
      %p171 = por %p169, %p170
      %p172 = scmp.ne.s32.totalorder %s160, %s161
      %p173 = scmp.eq.s32.totalorder %s27, 3
      %p174 = por %p172, %p173
      %p176 = scmp.ne.s32.totalorder %s161, %s175
      %p177 = scmp.eq.s32.totalorder %s27, 0
      %p178 = por %p176, %p177
      %s179 = ssub.s32 %s28, %s40
      %s180 = ssub.s32 %s29, %s36
      %s181 = sor.u32 %s179, %s180
      %p182 = scmp.eq.s32.totalorder %s181, 0
      %s184 = sadd.s32 %s183, 1
      %s185 = scalar_select %p182, %s183, %s184
      %p188 = pneg %p182
      %p189 = scmp.eq.s32.totalorder %s21, 3
      %p190 = por %p188, %p189
      %p191 = scmp.ne.s32.totalorder %s183, %s186
      %p192 = scmp.eq.s32.totalorder %s21, 0
      %p193 = por %p191, %p192
      %p194 = scmp.ne.s32.totalorder %s183, %s186
      %p195 = scmp.eq.s32.totalorder %s26, 3
      %p196 = por %p194, %p195
      %p197 = scmp.ne.s32.totalorder %s186, %s187
      %p198 = scmp.eq.s32.totalorder %s26, 0
      %p199 = por %p197, %p198
      %p200 = scmp.ne.s32.totalorder %s186, %s187
      %p201 = scmp.eq.s32.totalorder %s27, 3
      %p202 = por %p200, %p201
      %p204 = scmp.ne.s32.totalorder %s187, %s203
      %p205 = scmp.eq.s32.totalorder %s27, 0
      %p206 = por %p204, %p205
      %s207 = ssub.s32 %s28, %s40
      %s208 = ssub.s32 %s29, %s36
      %s209 = sor.u32 %s207, %s208
      %p210 = scmp.eq.s32.totalorder %s209, 0
      %s212 = sadd.s32 %s211, 1
      %s213 = scalar_select %p210, %s211, %s212
      %p216 = pneg %p210
      %p217 = scmp.eq.s32.totalorder %s21, 3
      %p218 = por %p216, %p217
      %p219 = scmp.ne.s32.totalorder %s211, %s214
      %p220 = scmp.eq.s32.totalorder %s21, 0
      %p221 = por %p219, %p220
      %p222 = scmp.ne.s32.totalorder %s211, %s214
      %p223 = scmp.eq.s32.totalorder %s26, 3
      %p224 = por %p222, %p223
      %p225 = scmp.ne.s32.totalorder %s214, %s215
      %p226 = scmp.eq.s32.totalorder %s26, 0
      %p227 = por %p225, %p226
      %p228 = scmp.ne.s32.totalorder %s214, %s215
      %p229 = scmp.eq.s32.totalorder %s27, 3
      %p230 = por %p228, %p229
      %p232 = scmp.ne.s32.totalorder %s215, %s231
      %p233 = scmp.eq.s32.totalorder %s27, 0
      %p234 = por %p232, %p233
      %p235 = scmp.le.s32.totalorder 1, %s21
      %p236 = scmp.lt.s32.totalorder %s21, 5
      %p237 = pnand %p235, %p236
      %p238 = pneg %p237
      // Predicated region
      $region9: #{tpu_custom_call.1} parent=5 // pred_check
        _
      $region10: #{tpu_custom_call.1} parent=5 // pred_check_branch
        %240 = sbr.rel (%p237) target = $region12
      $region11: #{tpu_custom_call.1} parent=5 // pred_region
        %s241 = ssub.s32 %s21, 1
        // Predicated region
        $region13: #{tpu_custom_call.1} parent=11 // pred_check
          %p242 = pneg %p82
        $region14: #{tpu_custom_call.1} parent=11 // pred_check_branch
          %244 = sbr.rel (%p242) target = $region16
        $region15: #{tpu_custom_call.1} parent=11 // pred_region
          _
        $region16: #{tpu_custom_call.1} parent=11 // pred_fallthru
          _
        // Predicated region
        $region17: #{tpu_custom_call.1} parent=11 // pred_check
          %p245 = pneg %p103
        $region18: #{tpu_custom_call.1} parent=11 // pred_check_branch
          %247 = sbr.rel (%p245) target = $region20
        $region19: #{tpu_custom_call.1} parent=11 // pred_region
          _
        $region20: #{tpu_custom_call.1} parent=11 // pred_fallthru
          _
        // Predicated region
        $region21: #{tpu_custom_call.1} parent=11 // pred_check
          %p248 = pneg %p150
        $region22: #{tpu_custom_call.1} parent=11 // pred_check_branch
          %250 = sbr.rel (%p248) target = $region24
        $region23: #{tpu_custom_call.1} parent=11 // pred_region
          %s252 = ssub.s32 2048, 2048
          %253 = vsyncadd [#allocation3], %s252
          %s254 = sshll.u32 [#allocation2], 4
          %s255 = int_to_ptr.vmem [resolvable:$true] %s254
          %260 = dma.hbm_to_vmem [thread:$0]  %s4, 2048, %s255, [#allocation3], 128, 128, 8
        $region24: #{tpu_custom_call.1} parent=11 // pred_fallthru
          _
        // Predicated region
        $region25: #{tpu_custom_call.1} parent=11 // pred_check
          %p261 = pneg %p171
        $region26: #{tpu_custom_call.1} parent=11 // pred_check_branch
          %263 = sbr.rel (%p261) target = $region28
        $region27: #{tpu_custom_call.1} parent=11 // pred_region
          _
        $region28: #{tpu_custom_call.1} parent=11 // pred_fallthru
          _
      $region12: #{tpu_custom_call.1} parent=5 // pred_fallthru
        _
      %p264 = scmp.lt.s32.totalorder %s21, 4
      // Predicated region
      $region29: #{tpu_custom_call.1} parent=5 // pred_check
        %p265 = pneg %p264
      $region30: #{tpu_custom_call.1} parent=5 // pred_check_branch
        %267 = sbr.rel (%p265) target = $region32
      $region31: #{tpu_custom_call.1} parent=5 // pred_region
        // Predicated region
        $region33: #{tpu_custom_call.1} parent=31 // pred_check
          %p268 = pneg %p55
        $region34: #{tpu_custom_call.1} parent=31 // pred_check_branch
          %270 = sbr.rel (%p268) target = $region36
        $region35: #{tpu_custom_call.1} parent=31 // pred_region
          %s271 = smul.u32 32, %s29
          %p272 = scmp.lt.s32.totalorder %s28, 1
          %s273 = scalar_select %p272, %s28, 1
          %p274 = scmp.lt.s32.totalorder %s271, 63
          %s275 = scalar_select %p274, %s271, 63
          %s276 = smul.addr %s273, 64
          %s277 = sadd.s32 %s275, %s276
          %s278 = smul.addr %s277, 4
          %s279 = scalar_lea.vmem %s0, %s278
          %s280 = smul.u32 32, %s29
        $region36: #{tpu_custom_call.1} parent=31 // pred_fallthru
          _
        // Predicated region
        $region37: #{tpu_custom_call.1} parent=31 // pred_check
          %p281 = pneg %p123
        $region38: #{tpu_custom_call.1} parent=31 // pred_check_branch
          %283 = sbr.rel (%p281) target = $region40
        $region39: #{tpu_custom_call.1} parent=31 // pred_region
          %s284 = smul.u32 32, %s29
          %p285 = scmp.lt.s32.totalorder %s284, 63
          %s286 = scalar_select %p285, %s284, 63
          %s287 = smul.addr %s286, 8
          %s288 = scalar_lea.vmem %s3, %s287
          %s289 = smul.u32 32, %s29
        $region40: #{tpu_custom_call.1} parent=31 // pred_fallthru
          _
      $region32: #{tpu_custom_call.1} parent=5 // pred_fallthru
        _
      %p290 = scmp.le.s32.totalorder 1, %s21
      %p291 = scmp.lt.s32.totalorder %s21, 5
      %p292 = pnand %p290, %p291
      %p293 = pneg %p292
      // Predicated region
      $region41: #{tpu_custom_call.1} parent=5 // pred_check
        _
      $region42: #{tpu_custom_call.1} parent=5 // pred_check_branch
        %295 = sbr.rel (%p292) target = $region44
      $region43: #{tpu_custom_call.1} parent=5 // pred_region
        %s296 = ssub.s32 %s21, 1
        // Predicated region
        $region45: #{tpu_custom_call.1} parent=43 // pred_check
          %p297 = pneg %p150
        $region46: #{tpu_custom_call.1} parent=43 // pred_check_branch
          %299 = sbr.rel (%p297) target = $region48
        $region47: #{tpu_custom_call.1} parent=43 // pred_region
          %300 = dma.done [#allocation3], 2048
        $region48: #{tpu_custom_call.1} parent=43 // pred_fallthru
          _
        %s301 = smul.u32 32, %s31
        %p302 = scmp.lt.s32.totalorder %s30, 1
        %s303 = scalar_select %p302, %s30, 1
        %p304 = scmp.lt.s32.totalorder %s301, 63
        %s305 = scalar_select %p304, %s301, 63
        %s306 = smul.addr %s303, 64
        %s307 = sadd.s32 %s305, %s306
        %s308 = smul.addr %s307, 4
        %s309 = scalar_lea.vmem %s0, %s308
        %p310 = pneg %p61
        %p311 = pneg %p58
        %p312 = pneg %p82
        %p313 = pneg %p79
        %p314 = pneg %p103
        %p315 = pneg %p100
        %s316 = smul.u32 32, %s31
        %p317 = scmp.lt.s32.totalorder %s316, 63
        %s318 = scalar_select %p317, %s316, 63
        %s319 = smul.addr %s318, 8
        %s320 = scalar_lea.vmem %s3, %s319
        %p321 = pneg %p129
        %p322 = pneg %p126
        %p323 = pneg %p150
        %p324 = pneg %p147
        %p325 = pneg %p171
        %p326 = pneg %p168
        %p327 = pneg %p199
        %p328 = pneg %p196
        %s329 = sand.u32 %s186, 1
        %s330 = scalar_lea.sflag [#allocation4], %s329
        %s331 = sand.u32 %s186, 1
        %s332 = smul.addr %s331, 128
        %s333 = scalar_lea.vmem [#allocation5], %s332
        %p334 = pneg %p227
        %p335 = pneg %p224
        %s336 = sand.u32 %s214, 1
        %s337 = scalar_lea.sflag [#allocation7], %s336
        %s338 = sand.u32 %s214, 1
        %s339 = smul.addr %s338, 256
        %s340 = scalar_lea.vmem [#allocation6], %s339
        %s341 = smul.u32 32, %s31
        %p342 = scmp.lt.s32.totalorder %s30, 1
        %s343 = scalar_select %p342, %s30, 1
        %p344 = scmp.lt.s32.totalorder %s341, 63
        %s345 = scalar_select %p344, %s341, 63
        %s346 = smul.addr %s343, 64
        %s347 = sadd.s32 %s345, %s346
        %s348 = smul.addr %s347, 4
        %s349 = scalar_lea.vmem %s0, %s348
        %s350 = smul.u32 32, %s31
        %s351 = smul.u32 32, %s31
        %p352 = scmp.lt.s32.totalorder %s351, 63
        %s353 = scalar_select %p352, %s351, 63
        %s354 = smul.addr %s353, 8
        %s355 = scalar_lea.vmem %s3, %s354
        %s356 = smul.u32 32, %s31
        %s357 = smul.u32 32, %s31
        %s358 = smul.u32 32, %s31
        %v360 = vld [vmem:[%s349] sm:$0xf]
        %v361 = vld [vmem:[%s349 + $0x4] sm:$0xf]
        %v362 = vld [vmem:[%s349 + $0x8] sm:$0xf]
        %v363 = vld [vmem:[%s349 + $0xc] sm:$0xf]
        %v364 = vld [vmem:[%s349 + $0x10] sm:$0xf]
        %v365 = vld [vmem:[%s349 + $0x14] sm:$0xf]
        %v366 = vld [vmem:[%s349 + $0x18] sm:$0xf]
        %v367 = vld [vmem:[%s349 + $0x1c] sm:$0xf]
        %v368 = vld [vmem:[%s349 + $0x20] sm:$0xf]
        %v369 = vld [vmem:[%s349 + $0x24] sm:$0xf]
        %v370 = vld [vmem:[%s349 + $0x28] sm:$0xf]
        %v371 = vld [vmem:[%s349 + $0x2c] sm:$0xf]
        %v372 = vld [vmem:[%s349 + $0x30] sm:$0xf]
        %v373 = vld [vmem:[%s349 + $0x34] sm:$0xf]
        %v374 = vld [vmem:[%s349 + $0x38] sm:$0xf]
        %v375 = vld [vmem:[%s349 + $0x3c] sm:$0xf]
        %v376 = vld [vmem:[%s349 + $0x40] sm:$0xf]
        %v377 = vld [vmem:[%s349 + $0x44] sm:$0xf]
        %v378 = vld [vmem:[%s349 + $0x48] sm:$0xf]
        %v379 = vld [vmem:[%s349 + $0x4c] sm:$0xf]
        %v380 = vld [vmem:[%s349 + $0x50] sm:$0xf]
        %v381 = vld [vmem:[%s349 + $0x54] sm:$0xf]
        %v382 = vld [vmem:[%s349 + $0x58] sm:$0xf]
        %v383 = vld [vmem:[%s349 + $0x5c] sm:$0xf]
        %v384 = vld [vmem:[%s349 + $0x60] sm:$0xf]
        %v385 = vld [vmem:[%s349 + $0x64] sm:$0xf]
        %v386 = vld [vmem:[%s349 + $0x68] sm:$0xf]
        %v387 = vld [vmem:[%s349 + $0x6c] sm:$0xf]
        %v388 = vld [vmem:[%s349 + $0x70] sm:$0xf]
        %v389 = vld [vmem:[%s349 + $0x74] sm:$0xf]
        %v390 = vld [vmem:[%s349 + $0x78] sm:$0xf]
        %v391 = vld [vmem:[%s349 + $0x7c] sm:$0xf]
        %v392 = vld [vmem:[%s1] sm:$0xf]
        %v393 = vld [vmem:[%s1 + $0x4] sm:$0xf]
        %v394 = vld [vmem:[%s2] sm:$0x1]
        %v396 = vlaneseq
        %v397 = vshrl.u32 %v396, 7
        %v398 = vsub.s32 0, %v397
        %v399 = vrot.slane %v394, %v398
        %v433 = vunpack.c.l.b16 %v360
        %v434 = vunpack.c.l.b16 %v361
        %v435 = vunpack.c.l.b16 %v362
        %v436 = vunpack.c.l.b16 %v363
        %v437 = vunpack.c.l.b16 %v364
        %v438 = vunpack.c.l.b16 %v365
        %v439 = vunpack.c.l.b16 %v366
        %v440 = vunpack.c.l.b16 %v367
        %v441 = vunpack.c.l.b16 %v368
        %v442 = vunpack.c.l.b16 %v369
        %v443 = vunpack.c.l.b16 %v370
        %v444 = vunpack.c.l.b16 %v371
        %v445 = vunpack.c.l.b16 %v372
        %v446 = vunpack.c.l.b16 %v373
        %v447 = vunpack.c.l.b16 %v374
        %v448 = vunpack.c.l.b16 %v375
        %v449 = vunpack.c.l.b16 %v376
        %v450 = vunpack.c.l.b16 %v377
        %v451 = vunpack.c.l.b16 %v378
        %v452 = vunpack.c.l.b16 %v379
        %v453 = vunpack.c.l.b16 %v380
        %v454 = vunpack.c.l.b16 %v381
        %v455 = vunpack.c.l.b16 %v382
        %v456 = vunpack.c.l.b16 %v383
        %v457 = vunpack.c.l.b16 %v384
        %v458 = vunpack.c.l.b16 %v385
        %v459 = vunpack.c.l.b16 %v386
        %v460 = vunpack.c.l.b16 %v387
        %v461 = vunpack.c.l.b16 %v388
        %v462 = vunpack.c.l.b16 %v389
        %v463 = vunpack.c.l.b16 %v390
        %v464 = vunpack.c.l.b16 %v391
        %v465 = vpack.c.b16 %v434, %v433
        %v466 = vpack.c.b16 %v436, %v435
        %v467 = vpack.c.b16 %v438, %v437
        %v468 = vpack.c.b16 %v440, %v439
        %v469 = vpack.c.b16 %v442, %v441
        %v470 = vpack.c.b16 %v444, %v443
        %v471 = vpack.c.b16 %v446, %v445
        %v472 = vpack.c.b16 %v448, %v447
        %v473 = vpack.c.b16 %v450, %v449
        %v474 = vpack.c.b16 %v452, %v451
        %v475 = vpack.c.b16 %v454, %v453
        %v476 = vpack.c.b16 %v456, %v455
        %v477 = vpack.c.b16 %v458, %v457
        %v478 = vpack.c.b16 %v460, %v459
        %v479 = vpack.c.b16 %v462, %v461
        %v480 = vpack.c.b16 %v464, %v463
        %v483 = vunpack.c.l.b16 %v392
        %v484 = vunpack.c.l.b16 %v393
        %v485 = vpack.c.b16 %v484, %v483
        %vm487 = vcmask 130048
        %v489 = vsel %vm487, %v465, 0
        %v492 = vsel %vm487, %v466, 0
        %v495 = vsel %vm487, %v467, 0
        %v498 = vsel %vm487, %v468, 0
        %v501 = vsel %vm487, %v469, 0
        %v504 = vsel %vm487, %v470, 0
        %v507 = vsel %vm487, %v471, 0
        %v510 = vsel %vm487, %v472, 0
        %v513 = vsel %vm487, %v473, 0
        %v516 = vsel %vm487, %v474, 0
        %v519 = vsel %vm487, %v475, 0
        %v522 = vsel %vm487, %v476, 0
        %v525 = vsel %vm487, %v477, 0
        %v528 = vsel %vm487, %v478, 0
        %v531 = vsel %vm487, %v479, 0
        %v534 = vsel %vm487, %v480, 0
        %536 = vmatprep.subr.bf16.mxu0 0
        %537 = vmatpush1.bf16.msra.mxu0 %v485
        %538 = vmatprep.subr.bf16.mxu0 0
        %539 = vmatpush1.bf16.msra.mxu0 0
        %540 = vmatprep.subr.bf16.mxu0 0
        %541 = vmatpush1.bf16.msra.mxu0 0
        %542 = vmatprep.subr.bf16.mxu0 0
        %543 = vmatpush1.bf16.msra.mxu0 0
        %544 = vmatprep.subr.bf16.mxu0 0
        %545 = vmatpush1.bf16.msra.mxu0 0
        %546 = vmatprep.subr.bf16.mxu0 0
        %547 = vmatpush1.bf16.msra.mxu0 0
        %548 = vmatprep.subr.bf16.mxu0 0
        %549 = vmatpush1.bf16.msra.mxu0 0
        %550 = vmatprep.subr.bf16.mxu0 0
        %551 = vmatpush1.bf16.msra.mxu0 0
        %552 = vmatprep.subr.bf16.mxu0 0
        %553 = vmatpush1.bf16.msra.mxu0 0
        %554 = vmatprep.subr.bf16.mxu0 0
        %555 = vmatpush1.bf16.msra.mxu0 0
        %556 = vmatprep.subr.bf16.mxu0 0
        %557 = vmatpush1.bf16.msra.mxu0 0
        %558 = vmatprep.subr.bf16.mxu0 0
        %559 = vmatpush1.bf16.msra.mxu0 0
        %560 = vmatprep.subr.bf16.mxu0 0
        %561 = vmatpush1.bf16.msra.mxu0 0
        %562 = vmatprep.subr.bf16.mxu0 0
        %563 = vmatpush1.bf16.msra.mxu0 0
        %564 = vmatprep.subr.bf16.mxu0 0
        %565 = vmatpush1.bf16.msra.mxu0 0
        %566 = vmatprep.subr.bf16.mxu0 0
        %567 = vmatpush1.bf16.msra.mxu0 0
        %568 = vmatprep.mubr.bf16.mxu0 0
        %569 = vmatmul.mubr.bf16.gmra.mrb[0].mxu0 %v489
        %v570 = vpop.f32.mrb[0].mxu0
        %v571 = vadd.f32 %v399, %v570
        %v572 = vpop.f32.mrb[0].mxu0
        %v573 = vpop.f32.mrb[0].mxu0
        %v574 = vadd.f32 %v399, %v573
        %v575 = vpop.f32.mrb[0].mxu0
        %576 = vmatprep.mubr.bf16.mxu0 0
        %577 = vmatmul.mubr.bf16.gmra.mrb[0].mxu0 %v492
        %v578 = vpop.f32.mrb[0].mxu0
        %v579 = vadd.f32 %v399, %v578
        %v580 = vpop.f32.mrb[0].mxu0
        %v581 = vpop.f32.mrb[0].mxu0
        %v582 = vadd.f32 %v399, %v581
        %v583 = vpop.f32.mrb[0].mxu0
        %584 = vmatprep.mubr.bf16.mxu0 0
        %585 = vmatmul.mubr.bf16.gmra.mrb[0].mxu0 %v495
        %v586 = vpop.f32.mrb[0].mxu0
        %v587 = vadd.f32 %v399, %v586
        %v588 = vpop.f32.mrb[0].mxu0
        %v589 = vpop.f32.mrb[0].mxu0
        %v590 = vadd.f32 %v399, %v589
        %v591 = vpop.f32.mrb[0].mxu0
        %592 = vmatprep.mubr.bf16.mxu0 0
        %593 = vmatmul.mubr.bf16.gmra.mrb[0].mxu0 %v498
        %v594 = vpop.f32.mrb[0].mxu0
        %v595 = vadd.f32 %v399, %v594
        %v596 = vpop.f32.mrb[0].mxu0
        %v597 = vpop.f32.mrb[0].mxu0
        %v598 = vadd.f32 %v399, %v597
        %v599 = vpop.f32.mrb[0].mxu0
        %600 = vmatprep.mubr.bf16.mxu0 0
        %601 = vmatmul.mubr.bf16.gmra.mrb[0].mxu0 %v501
        %v602 = vpop.f32.mrb[0].mxu0
        %v603 = vadd.f32 %v399, %v602
        %v604 = vpop.f32.mrb[0].mxu0
        %v605 = vpop.f32.mrb[0].mxu0
        %v606 = vadd.f32 %v399, %v605
        %v607 = vpop.f32.mrb[0].mxu0
        %608 = vmatprep.mubr.bf16.mxu0 0
        %609 = vmatmul.mubr.bf16.gmra.mrb[0].mxu0 %v504
        %v610 = vpop.f32.mrb[0].mxu0
        %v611 = vadd.f32 %v399, %v610
        %v612 = vpop.f32.mrb[0].mxu0
        %v613 = vpop.f32.mrb[0].mxu0
        %v614 = vadd.f32 %v399, %v613
        %v615 = vpop.f32.mrb[0].mxu0
        %616 = vmatprep.mubr.bf16.mxu0 0
        %617 = vmatmul.mubr.bf16.gmra.mrb[0].mxu0 %v507
        %v618 = vpop.f32.mrb[0].mxu0
        %v619 = vadd.f32 %v399, %v618
        %v620 = vpop.f32.mrb[0].mxu0
        %v621 = vpop.f32.mrb[0].mxu0
        %v622 = vadd.f32 %v399, %v621
        %v623 = vpop.f32.mrb[0].mxu0
        %624 = vmatprep.mubr.bf16.mxu0 0
        %625 = vmatmul.mubr.bf16.gmra.mrb[0].mxu0 %v510
        %v626 = vpop.f32.mrb[0].mxu0
        %v627 = vadd.f32 %v399, %v626
        %v628 = vpop.f32.mrb[0].mxu0
        %v629 = vpop.f32.mrb[0].mxu0
        %v630 = vadd.f32 %v399, %v629
        %v631 = vpop.f32.mrb[0].mxu0
        %632 = vmatprep.mubr.bf16.mxu0 0
        %633 = vmatmul.mubr.bf16.gmra.mrb[0].mxu0 %v513
        %v634 = vpop.f32.mrb[0].mxu0
        %v635 = vadd.f32 %v399, %v634
        %v636 = vpop.f32.mrb[0].mxu0
        %v637 = vpop.f32.mrb[0].mxu0
        %v638 = vadd.f32 %v399, %v637
        %v639 = vpop.f32.mrb[0].mxu0
        %640 = vmatprep.mubr.bf16.mxu0 0
        %641 = vmatmul.mubr.bf16.gmra.mrb[0].mxu0 %v516
        %v642 = vpop.f32.mrb[0].mxu0
        %v643 = vadd.f32 %v399, %v642
        %v644 = vpop.f32.mrb[0].mxu0
        %v645 = vpop.f32.mrb[0].mxu0
        %v646 = vadd.f32 %v399, %v645
        %v647 = vpop.f32.mrb[0].mxu0
        %648 = vmatprep.mubr.bf16.mxu0 0
        %649 = vmatmul.mubr.bf16.gmra.mrb[0].mxu0 %v519
        %v650 = vpop.f32.mrb[0].mxu0
        %v651 = vadd.f32 %v399, %v650
        %v652 = vpop.f32.mrb[0].mxu0
        %v653 = vpop.f32.mrb[0].mxu0
        %v654 = vadd.f32 %v399, %v653
        %v655 = vpop.f32.mrb[0].mxu0
        %656 = vmatprep.mubr.bf16.mxu0 0
        %657 = vmatmul.mubr.bf16.gmra.mrb[0].mxu0 %v522
        %v658 = vpop.f32.mrb[0].mxu0
        %v659 = vadd.f32 %v399, %v658
        %v660 = vpop.f32.mrb[0].mxu0
        %v661 = vpop.f32.mrb[0].mxu0
        %v662 = vadd.f32 %v399, %v661
        %v663 = vpop.f32.mrb[0].mxu0
        %664 = vmatprep.mubr.bf16.mxu0 0
        %665 = vmatmul.mubr.bf16.gmra.mrb[0].mxu0 %v525
        %v666 = vpop.f32.mrb[0].mxu0
        %v667 = vadd.f32 %v399, %v666
        %v668 = vpop.f32.mrb[0].mxu0
        %v669 = vpop.f32.mrb[0].mxu0
        %v670 = vadd.f32 %v399, %v669
        %v671 = vpop.f32.mrb[0].mxu0
        %672 = vmatprep.mubr.bf16.mxu0 0
        %673 = vmatmul.mubr.bf16.gmra.mrb[0].mxu0 %v528
        %v674 = vpop.f32.mrb[0].mxu0
        %v675 = vadd.f32 %v399, %v674
        %v676 = vpop.f32.mrb[0].mxu0
        %v677 = vpop.f32.mrb[0].mxu0
        %v678 = vadd.f32 %v399, %v677
        %v679 = vpop.f32.mrb[0].mxu0
        %680 = vmatprep.mubr.bf16.mxu0 0
        %681 = vmatmul.mubr.bf16.gmra.mrb[0].mxu0 %v531
        %v682 = vpop.f32.mrb[0].mxu0
        %v683 = vadd.f32 %v399, %v682
        %v684 = vpop.f32.mrb[0].mxu0
        %v685 = vpop.f32.mrb[0].mxu0
        %v686 = vadd.f32 %v399, %v685
        %v687 = vpop.f32.mrb[0].mxu0
        %688 = vmatprep.mubr.bf16.mxu0 0
        %689 = vmatmul.mubr.bf16.gmra.mrb[0].mxu0 %v534
        %v690 = vpop.f32.mrb[0].mxu0
        %v691 = vadd.f32 %v399, %v690
        %v692 = vpop.f32.mrb[0].mxu0
        %v693 = vpop.f32.mrb[0].mxu0
        %v694 = vadd.f32 %v399, %v693
        %v695 = vpop.f32.mrb[0].mxu0
        %696 = vdwg.mxu0
        %v697 = vld [vmem:[%s355] sm:$0xff]
        %v698 = vld [vmem:[%s355 + $0x8] sm:$0xff]
        %v699 = vld [vmem:[%s355 + $0x10] sm:$0xff]
        %v700 = vld [vmem:[%s355 + $0x18] sm:$0xff]
        %v701 = vld [vmem:[%s355 + $0x20] sm:$0xff]
        %v702 = vld [vmem:[%s355 + $0x28] sm:$0xff]
        %v703 = vld [vmem:[%s355 + $0x30] sm:$0xff]
        %v704 = vld [vmem:[%s355 + $0x38] sm:$0xff]
        %v705 = vld [vmem:[%s355 + $0x40] sm:$0xff]
        %v706 = vld [vmem:[%s355 + $0x48] sm:$0xff]
        %v707 = vld [vmem:[%s355 + $0x50] sm:$0xff]
        %v708 = vld [vmem:[%s355 + $0x58] sm:$0xff]
        %v709 = vld [vmem:[%s355 + $0x60] sm:$0xff]
        %v710 = vld [vmem:[%s355 + $0x68] sm:$0xff]
        %v711 = vld [vmem:[%s355 + $0x70] sm:$0xff]
        %v712 = vld [vmem:[%s355 + $0x78] sm:$0xff]
        %v713 = vld [vmem:[%s355 + $0x80] sm:$0xff]
        %v714 = vld [vmem:[%s355 + $0x88] sm:$0xff]
        %v715 = vld [vmem:[%s355 + $0x90] sm:$0xff]
        %v716 = vld [vmem:[%s355 + $0x98] sm:$0xff]
        %v717 = vld [vmem:[%s355 + $0xa0] sm:$0xff]
        %v718 = vld [vmem:[%s355 + $0xa8] sm:$0xff]
        %v719 = vld [vmem:[%s355 + $0xb0] sm:$0xff]
        %v720 = vld [vmem:[%s355 + $0xb8] sm:$0xff]
        %v721 = vld [vmem:[%s355 + $0xc0] sm:$0xff]
        %v722 = vld [vmem:[%s355 + $0xc8] sm:$0xff]
        %v723 = vld [vmem:[%s355 + $0xd0] sm:$0xff]
        %v724 = vld [vmem:[%s355 + $0xd8] sm:$0xff]
        %v725 = vld [vmem:[%s355 + $0xe0] sm:$0xff]
        %v726 = vld [vmem:[%s355 + $0xe8] sm:$0xff]
        %v727 = vld [vmem:[%s355 + $0xf0] sm:$0xff]
        %v728 = vld [vmem:[%s355 + $0xf8] sm:$0xff]
        %v729 = vadd.f32 %v571, %v697
        %v730 = vadd.f32 %v574, %v698
        %v731 = vadd.f32 %v579, %v699
        %v732 = vadd.f32 %v582, %v700
        %v733 = vadd.f32 %v587, %v701
        %v734 = vadd.f32 %v590, %v702
        %v735 = vadd.f32 %v595, %v703
        %v736 = vadd.f32 %v598, %v704
        %v737 = vadd.f32 %v603, %v705
        %v738 = vadd.f32 %v606, %v706
        %v739 = vadd.f32 %v611, %v707
        %v740 = vadd.f32 %v614, %v708
        %v741 = vadd.f32 %v619, %v709
        %v742 = vadd.f32 %v622, %v710
        %v743 = vadd.f32 %v627, %v711
        %v744 = vadd.f32 %v630, %v712
        %v745 = vadd.f32 %v635, %v713
        %v746 = vadd.f32 %v638, %v714
        %v747 = vadd.f32 %v643, %v715
        %v748 = vadd.f32 %v646, %v716
        %v749 = vadd.f32 %v651, %v717
        %v750 = vadd.f32 %v654, %v718
        %v751 = vadd.f32 %v659, %v719
        %v752 = vadd.f32 %v662, %v720
        %v753 = vadd.f32 %v667, %v721
        %v754 = vadd.f32 %v670, %v722
        %v755 = vadd.f32 %v675, %v723
        %v756 = vadd.f32 %v678, %v724
        %v757 = vadd.f32 %v683, %v725
        %v758 = vadd.f32 %v686, %v726
        %v759 = vadd.f32 %v691, %v727
        %v760 = vadd.f32 %v694, %v728
        %v761 = vpack.c.bf16 %v730, %v729
        %v762 = vpack.c.bf16 %v732, %v731
        %v763 = vpack.c.bf16 %v734, %v733
        %v764 = vpack.c.bf16 %v736, %v735
        %v765 = vpack.c.bf16 %v738, %v737
        %v766 = vpack.c.bf16 %v740, %v739
        %v767 = vpack.c.bf16 %v742, %v741
        %v768 = vpack.c.bf16 %v744, %v743
        %v769 = vpack.c.bf16 %v746, %v745
        %v770 = vpack.c.bf16 %v748, %v747
        %v771 = vpack.c.bf16 %v750, %v749
        %v772 = vpack.c.bf16 %v752, %v751
        %v773 = vpack.c.bf16 %v754, %v753
        %v774 = vpack.c.bf16 %v756, %v755
        %v775 = vpack.c.bf16 %v758, %v757
        %v776 = vpack.c.bf16 %v760, %v759
        %v793 = vunpack.c.l.b16 %v761
        %v794 = vunpack.c.h.b16 %v761
        %v795 = vunpack.c.l.b16 %v762
        %v796 = vunpack.c.h.b16 %v762
        %v797 = vunpack.c.l.b16 %v763
        %v798 = vunpack.c.h.b16 %v763
        %v799 = vunpack.c.l.b16 %v764
        %v800 = vunpack.c.h.b16 %v764
        %v801 = vunpack.c.l.b16 %v765
        %v802 = vunpack.c.h.b16 %v765
        %v803 = vunpack.c.l.b16 %v766
        %v804 = vunpack.c.h.b16 %v766
        %v805 = vunpack.c.l.b16 %v767
        %v806 = vunpack.c.h.b16 %v767
        %v807 = vunpack.c.l.b16 %v768
        %v808 = vunpack.c.h.b16 %v768
        %v809 = vunpack.c.l.b16 %v769
        %v810 = vunpack.c.h.b16 %v769
        %v811 = vunpack.c.l.b16 %v770
        %v812 = vunpack.c.h.b16 %v770
        %v813 = vunpack.c.l.b16 %v771
        %v814 = vunpack.c.h.b16 %v771
        %v815 = vunpack.c.l.b16 %v772
        %v816 = vunpack.c.h.b16 %v772
        %v817 = vunpack.c.l.b16 %v773
        %v818 = vunpack.c.h.b16 %v773
        %v819 = vunpack.c.l.b16 %v774
        %v820 = vunpack.c.h.b16 %v774
        %v821 = vunpack.c.l.b16 %v775
        %v822 = vunpack.c.h.b16 %v775
        %v823 = vunpack.c.l.b16 %v776
        %v824 = vunpack.c.h.b16 %v776
        %v825 = vpack.c.b16 %v793, %v793
        %v826 = vpack.c.b16 %v794, %v794
        %v827 = vpack.c.b16 %v795, %v795
        %v828 = vpack.c.b16 %v796, %v796
        %v829 = vpack.c.b16 %v797, %v797
        %v830 = vpack.c.b16 %v798, %v798
        %v831 = vpack.c.b16 %v799, %v799
        %v832 = vpack.c.b16 %v800, %v800
        %v833 = vpack.c.b16 %v801, %v801
        %v834 = vpack.c.b16 %v802, %v802
        %v835 = vpack.c.b16 %v803, %v803
        %v836 = vpack.c.b16 %v804, %v804
        %v837 = vpack.c.b16 %v805, %v805
        %v838 = vpack.c.b16 %v806, %v806
        %v839 = vpack.c.b16 %v807, %v807
        %v840 = vpack.c.b16 %v808, %v808
        %v841 = vpack.c.b16 %v809, %v809
        %v842 = vpack.c.b16 %v810, %v810
        %v843 = vpack.c.b16 %v811, %v811
        %v844 = vpack.c.b16 %v812, %v812
        %v845 = vpack.c.b16 %v813, %v813
        %v846 = vpack.c.b16 %v814, %v814
        %v847 = vpack.c.b16 %v815, %v815
        %v848 = vpack.c.b16 %v816, %v816
        %v849 = vpack.c.b16 %v817, %v817
        %v850 = vpack.c.b16 %v818, %v818
        %v851 = vpack.c.b16 %v819, %v819
        %v852 = vpack.c.b16 %v820, %v820
        %v853 = vpack.c.b16 %v821, %v821
        %v854 = vpack.c.b16 %v822, %v822
        %v855 = vpack.c.b16 %v823, %v823
        %v856 = vpack.c.b16 %v824, %v824
        %889 = vst [vmem:[%s333] sm:$0xf] %v825
        %890 = vst [vmem:[%s333 + $0x4] sm:$0xf] %v826
        %891 = vst [vmem:[%s333 + $0x8] sm:$0xf] %v827
        %892 = vst [vmem:[%s333 + $0xc] sm:$0xf] %v828
        %893 = vst [vmem:[%s333 + $0x10] sm:$0xf] %v829
        %894 = vst [vmem:[%s333 + $0x14] sm:$0xf] %v830
        %895 = vst [vmem:[%s333 + $0x18] sm:$0xf] %v831
        %896 = vst [vmem:[%s333 + $0x1c] sm:$0xf] %v832
        %897 = vst [vmem:[%s333 + $0x20] sm:$0xf] %v833
        %898 = vst [vmem:[%s333 + $0x24] sm:$0xf] %v834
        %899 = vst [vmem:[%s333 + $0x28] sm:$0xf] %v835
        %900 = vst [vmem:[%s333 + $0x2c] sm:$0xf] %v836
        %901 = vst [vmem:[%s333 + $0x30] sm:$0xf] %v837
        %902 = vst [vmem:[%s333 + $0x34] sm:$0xf] %v838
        %903 = vst [vmem:[%s333 + $0x38] sm:$0xf] %v839
        %904 = vst [vmem:[%s333 + $0x3c] sm:$0xf] %v840
        %905 = vst [vmem:[%s333 + $0x40] sm:$0xf] %v841
        %906 = vst [vmem:[%s333 + $0x44] sm:$0xf] %v842
        %907 = vst [vmem:[%s333 + $0x48] sm:$0xf] %v843
        %908 = vst [vmem:[%s333 + $0x4c] sm:$0xf] %v844
        %909 = vst [vmem:[%s333 + $0x50] sm:$0xf] %v845
        %910 = vst [vmem:[%s333 + $0x54] sm:$0xf] %v846
        %911 = vst [vmem:[%s333 + $0x58] sm:$0xf] %v847
        %912 = vst [vmem:[%s333 + $0x5c] sm:$0xf] %v848
        %913 = vst [vmem:[%s333 + $0x60] sm:$0xf] %v849
        %914 = vst [vmem:[%s333 + $0x64] sm:$0xf] %v850
        %915 = vst [vmem:[%s333 + $0x68] sm:$0xf] %v851
        %916 = vst [vmem:[%s333 + $0x6c] sm:$0xf] %v852
        %917 = vst [vmem:[%s333 + $0x70] sm:$0xf] %v853
        %918 = vst [vmem:[%s333 + $0x74] sm:$0xf] %v854
        %919 = vst [vmem:[%s333 + $0x78] sm:$0xf] %v855
        %920 = vst [vmem:[%s333 + $0x7c] sm:$0xf] %v856
        %v921 = vld [vmem:[#allocation2] sm:$0xff]
        %v922 = vld [vmem:[#allocation2 + $0x8] sm:$0xff]
        %v923 = vld [vmem:[#allocation2 + $0x10] sm:$0xff]
        %v924 = vld [vmem:[#allocation2 + $0x18] sm:$0xff]
        %v925 = vld [vmem:[#allocation2 + $0x20] sm:$0xff]
        %v926 = vld [vmem:[#allocation2 + $0x28] sm:$0xff]
        %v927 = vld [vmem:[#allocation2 + $0x30] sm:$0xff]
        %v928 = vld [vmem:[#allocation2 + $0x38] sm:$0xff]
        %v929 = vld [vmem:[#allocation2 + $0x40] sm:$0xff]
        %v930 = vld [vmem:[#allocation2 + $0x48] sm:$0xff]
        %v931 = vld [vmem:[#allocation2 + $0x50] sm:$0xff]
        %v932 = vld [vmem:[#allocation2 + $0x58] sm:$0xff]
        %v933 = vld [vmem:[#allocation2 + $0x60] sm:$0xff]
        %v934 = vld [vmem:[#allocation2 + $0x68] sm:$0xff]
        %v935 = vld [vmem:[#allocation2 + $0x70] sm:$0xff]
        %v936 = vld [vmem:[#allocation2 + $0x78] sm:$0xff]
        %v937 = vld [vmem:[%s5] sm:$0x3]
        %v939 = vlaneseq
        %v940 = vshrl.u32 %v939, 7
        %v941 = vsub.s32 0, %v940
        %v942 = vrot.slane %v937, %v941
        %v943 = vlaneseq
        %v944 = vshrl.u32 %v943, 7
        %v945 = vsub.s32 1, %v944
        %v946 = vrot.slane %v937, %v945
        %v965 = vunpack.c.l.b16 %v921
        %v966 = vunpack.c.h.b16 %v921
        %v967 = vunpack.c.l.b16 %v922
        %v968 = vunpack.c.h.b16 %v922
        %v969 = vunpack.c.l.b16 %v923
        %v970 = vunpack.c.h.b16 %v923
        %v971 = vunpack.c.l.b16 %v924
        %v972 = vunpack.c.h.b16 %v924
        %v973 = vunpack.c.l.b16 %v925
        %v974 = vunpack.c.h.b16 %v925
        %v975 = vunpack.c.l.b16 %v926
        %v976 = vunpack.c.h.b16 %v926
        %v977 = vunpack.c.l.b16 %v927
        %v978 = vunpack.c.h.b16 %v927
        %v979 = vunpack.c.l.b16 %v928
        %v980 = vunpack.c.h.b16 %v928
        %v981 = vunpack.c.l.b16 %v929
        %v982 = vunpack.c.h.b16 %v929
        %v983 = vunpack.c.l.b16 %v930
        %v984 = vunpack.c.h.b16 %v930
        %v985 = vunpack.c.l.b16 %v931
        %v986 = vunpack.c.h.b16 %v931
        %v987 = vunpack.c.l.b16 %v932
        %v988 = vunpack.c.h.b16 %v932
        %v989 = vunpack.c.l.b16 %v933
        %v990 = vunpack.c.h.b16 %v933
        %v991 = vunpack.c.l.b16 %v934
        %v992 = vunpack.c.h.b16 %v934
        %v993 = vunpack.c.l.b16 %v935
        %v994 = vunpack.c.h.b16 %v935
        %v995 = vunpack.c.l.b16 %v936
        %v996 = vunpack.c.h.b16 %v936
        %v997 = vpack.c.b16 %v967, %v965
        %v998 = vpack.c.b16 %v968, %v966
        %v999 = vpack.c.b16 %v971, %v969
        %v1000 = vpack.c.b16 %v972, %v970
        %v1001 = vpack.c.b16 %v975, %v973
        %v1002 = vpack.c.b16 %v976, %v974
        %v1003 = vpack.c.b16 %v979, %v977
        %v1004 = vpack.c.b16 %v980, %v978
        %v1005 = vpack.c.b16 %v983, %v981
        %v1006 = vpack.c.b16 %v984, %v982
        %v1007 = vpack.c.b16 %v987, %v985
        %v1008 = vpack.c.b16 %v988, %v986
        %v1009 = vpack.c.b16 %v991, %v989
        %v1010 = vpack.c.b16 %v992, %v990
        %v1011 = vpack.c.b16 %v995, %v993
        %v1012 = vpack.c.b16 %v996, %v994
        %1029 = vmatprep.subr.bf16.mxu0 %v998
        %1030 = vmatpush1.bf16.msra.mxu0 %v997
        %1031 = vmatprep.subr.bf16.mxu0 %v1000
        %1032 = vmatpush1.bf16.msra.mxu0 %v999
        %1033 = vmatprep.subr.bf16.mxu0 %v1002
        %1034 = vmatpush1.bf16.msra.mxu0 %v1001
        %1035 = vmatprep.subr.bf16.mxu0 %v1004
        %1036 = vmatpush1.bf16.msra.mxu0 %v1003
        %1037 = vmatprep.subr.bf16.mxu0 %v1006
        %1038 = vmatpush1.bf16.msra.mxu0 %v1005
        %1039 = vmatprep.subr.bf16.mxu0 %v1008
        %1040 = vmatpush1.bf16.msra.mxu0 %v1007
        %1041 = vmatprep.subr.bf16.mxu0 %v1010
        %1042 = vmatpush1.bf16.msra.mxu0 %v1009
        %1043 = vmatprep.subr.bf16.mxu0 %v1012
        %1044 = vmatpush1.bf16.msra.mxu0 %v1011
        %1045 = vmatprep.subr.bf16.mxu0 0
        %1046 = vmatpush1.bf16.msra.mxu0 0
        %1047 = vmatprep.subr.bf16.mxu0 0
        %1048 = vmatpush1.bf16.msra.mxu0 0
        %1049 = vmatprep.subr.bf16.mxu0 0
        %1050 = vmatpush1.bf16.msra.mxu0 0
        %1051 = vmatprep.subr.bf16.mxu0 0
        %1052 = vmatpush1.bf16.msra.mxu0 0
        %1053 = vmatprep.subr.bf16.mxu0 0
        %1054 = vmatpush1.bf16.msra.mxu0 0
        %1055 = vmatprep.subr.bf16.mxu0 0
        %1056 = vmatpush1.bf16.msra.mxu0 0
        %1057 = vmatprep.subr.bf16.mxu0 0
        %1058 = vmatpush1.bf16.msra.mxu0 0
        %1059 = vmatprep.subr.bf16.mxu0 0
        %1060 = vmatpush1.bf16.msra.mxu0 0
        %1061 = vmatprep.mubr.bf16.mxu0 0
        %1062 = vmatmul.mubr.bf16.gmra.mrb[0].mxu0 %v761
        %v1063 = vpop.f32.mrb[0].mxu0
        %v1064 = vadd.f32 %v942, %v1063
        %v1065 = vpop.f32.mrb[0].mxu0
        %v1066 = vadd.f32 %v946, %v1065
        %v1067 = vpop.f32.mrb[0].mxu0
        %v1068 = vadd.f32 %v942, %v1067
        %v1069 = vpop.f32.mrb[0].mxu0
        %v1070 = vadd.f32 %v946, %v1069
        %1071 = vmatprep.mubr.bf16.mxu0 0
        %1072 = vmatmul.mubr.bf16.gmra.mrb[0].mxu0 %v762
        %v1073 = vpop.f32.mrb[0].mxu0
        %v1074 = vadd.f32 %v942, %v1073
        %v1075 = vpop.f32.mrb[0].mxu0
        %v1076 = vadd.f32 %v946, %v1075
        %v1077 = vpop.f32.mrb[0].mxu0
        %v1078 = vadd.f32 %v942, %v1077
        %v1079 = vpop.f32.mrb[0].mxu0
        %v1080 = vadd.f32 %v946, %v1079
        %1081 = vmatprep.mubr.bf16.mxu0 0
        %1082 = vmatmul.mubr.bf16.gmra.mrb[0].mxu0 %v763
        %v1083 = vpop.f32.mrb[0].mxu0
        %v1084 = vadd.f32 %v942, %v1083
        %v1085 = vpop.f32.mrb[0].mxu0
        %v1086 = vadd.f32 %v946, %v1085
        %v1087 = vpop.f32.mrb[0].mxu0
        %v1088 = vadd.f32 %v942, %v1087
        %v1089 = vpop.f32.mrb[0].mxu0
        %v1090 = vadd.f32 %v946, %v1089
        %1091 = vmatprep.mubr.bf16.mxu0 0
        %1092 = vmatmul.mubr.bf16.gmra.mrb[0].mxu0 %v764
        %v1093 = vpop.f32.mrb[0].mxu0
        %v1094 = vadd.f32 %v942, %v1093
        %v1095 = vpop.f32.mrb[0].mxu0
        %v1096 = vadd.f32 %v946, %v1095
        %v1097 = vpop.f32.mrb[0].mxu0
        %v1098 = vadd.f32 %v942, %v1097
        %v1099 = vpop.f32.mrb[0].mxu0
        %v1100 = vadd.f32 %v946, %v1099
        %1101 = vmatprep.mubr.bf16.mxu0 0
        %1102 = vmatmul.mubr.bf16.gmra.mrb[0].mxu0 %v765
        %v1103 = vpop.f32.mrb[0].mxu0
        %v1104 = vadd.f32 %v942, %v1103
        %v1105 = vpop.f32.mrb[0].mxu0
        %v1106 = vadd.f32 %v946, %v1105
        %v1107 = vpop.f32.mrb[0].mxu0
        %v1108 = vadd.f32 %v942, %v1107
        %v1109 = vpop.f32.mrb[0].mxu0
        %v1110 = vadd.f32 %v946, %v1109
        %1111 = vmatprep.mubr.bf16.mxu0 0
        %1112 = vmatmul.mubr.bf16.gmra.mrb[0].mxu0 %v766
        %v1113 = vpop.f32.mrb[0].mxu0
        %v1114 = vadd.f32 %v942, %v1113
        %v1115 = vpop.f32.mrb[0].mxu0
        %v1116 = vadd.f32 %v946, %v1115
        %v1117 = vpop.f32.mrb[0].mxu0
        %v1118 = vadd.f32 %v942, %v1117
        %v1119 = vpop.f32.mrb[0].mxu0
        %v1120 = vadd.f32 %v946, %v1119
        %1121 = vmatprep.mubr.bf16.mxu0 0
        %1122 = vmatmul.mubr.bf16.gmra.mrb[0].mxu0 %v767
        %v1123 = vpop.f32.mrb[0].mxu0
        %v1124 = vadd.f32 %v942, %v1123
        %v1125 = vpop.f32.mrb[0].mxu0
        %v1126 = vadd.f32 %v946, %v1125
        %v1127 = vpop.f32.mrb[0].mxu0
        %v1128 = vadd.f32 %v942, %v1127
        %v1129 = vpop.f32.mrb[0].mxu0
        %v1130 = vadd.f32 %v946, %v1129
        %1131 = vmatprep.mubr.bf16.mxu0 0
        %1132 = vmatmul.mubr.bf16.gmra.mrb[0].mxu0 %v768
        %v1133 = vpop.f32.mrb[0].mxu0
        %v1134 = vadd.f32 %v942, %v1133
        %v1135 = vpop.f32.mrb[0].mxu0
        %v1136 = vadd.f32 %v946, %v1135
        %v1137 = vpop.f32.mrb[0].mxu0
        %v1138 = vadd.f32 %v942, %v1137
        %v1139 = vpop.f32.mrb[0].mxu0
        %v1140 = vadd.f32 %v946, %v1139
        %1141 = vmatprep.mubr.bf16.mxu0 0
        %1142 = vmatmul.mubr.bf16.gmra.mrb[0].mxu0 %v769
        %v1143 = vpop.f32.mrb[0].mxu0
        %v1144 = vadd.f32 %v942, %v1143
        %v1145 = vpop.f32.mrb[0].mxu0
        %v1146 = vadd.f32 %v946, %v1145
        %v1147 = vpop.f32.mrb[0].mxu0
        %v1148 = vadd.f32 %v942, %v1147
        %v1149 = vpop.f32.mrb[0].mxu0
        %v1150 = vadd.f32 %v946, %v1149
        %1151 = vmatprep.mubr.bf16.mxu0 0
        %1152 = vmatmul.mubr.bf16.gmra.mrb[0].mxu0 %v770
        %v1153 = vpop.f32.mrb[0].mxu0
        %v1154 = vadd.f32 %v942, %v1153
        %v1155 = vpop.f32.mrb[0].mxu0
        %v1156 = vadd.f32 %v946, %v1155
        %v1157 = vpop.f32.mrb[0].mxu0
        %v1158 = vadd.f32 %v942, %v1157
        %v1159 = vpop.f32.mrb[0].mxu0
        %v1160 = vadd.f32 %v946, %v1159
        %1161 = vmatprep.mubr.bf16.mxu0 0
        %1162 = vmatmul.mubr.bf16.gmra.mrb[0].mxu0 %v771
        %v1163 = vpop.f32.mrb[0].mxu0
        %v1164 = vadd.f32 %v942, %v1163
        %v1165 = vpop.f32.mrb[0].mxu0
        %v1166 = vadd.f32 %v946, %v1165
        %v1167 = vpop.f32.mrb[0].mxu0
        %v1168 = vadd.f32 %v942, %v1167
        %v1169 = vpop.f32.mrb[0].mxu0
        %v1170 = vadd.f32 %v946, %v1169
        %1171 = vmatprep.mubr.bf16.mxu0 0
        %1172 = vmatmul.mubr.bf16.gmra.mrb[0].mxu0 %v772
        %v1173 = vpop.f32.mrb[0].mxu0
        %v1174 = vadd.f32 %v942, %v1173
        %v1175 = vpop.f32.mrb[0].mxu0
        %v1176 = vadd.f32 %v946, %v1175
        %v1177 = vpop.f32.mrb[0].mxu0
        %v1178 = vadd.f32 %v942, %v1177
        %v1179 = vpop.f32.mrb[0].mxu0
        %v1180 = vadd.f32 %v946, %v1179
        %1181 = vmatprep.mubr.bf16.mxu0 0
        %1182 = vmatmul.mubr.bf16.gmra.mrb[0].mxu0 %v773
        %v1183 = vpop.f32.mrb[0].mxu0
        %v1184 = vadd.f32 %v942, %v1183
        %v1185 = vpop.f32.mrb[0].mxu0
        %v1186 = vadd.f32 %v946, %v1185
        %v1187 = vpop.f32.mrb[0].mxu0
        %v1188 = vadd.f32 %v942, %v1187
        %v1189 = vpop.f32.mrb[0].mxu0
        %v1190 = vadd.f32 %v946, %v1189
        %1191 = vmatprep.mubr.bf16.mxu0 0
        %1192 = vmatmul.mubr.bf16.gmra.mrb[0].mxu0 %v774
        %v1193 = vpop.f32.mrb[0].mxu0
        %v1194 = vadd.f32 %v942, %v1193
        %v1195 = vpop.f32.mrb[0].mxu0
        %v1196 = vadd.f32 %v946, %v1195
        %v1197 = vpop.f32.mrb[0].mxu0
        %v1198 = vadd.f32 %v942, %v1197
        %v1199 = vpop.f32.mrb[0].mxu0
        %v1200 = vadd.f32 %v946, %v1199
        %1201 = vmatprep.mubr.bf16.mxu0 0
        %1202 = vmatmul.mubr.bf16.gmra.mrb[0].mxu0 %v775
        %v1203 = vpop.f32.mrb[0].mxu0
        %v1204 = vadd.f32 %v942, %v1203
        %v1205 = vpop.f32.mrb[0].mxu0
        %v1206 = vadd.f32 %v946, %v1205
        %v1207 = vpop.f32.mrb[0].mxu0
        %v1208 = vadd.f32 %v942, %v1207
        %v1209 = vpop.f32.mrb[0].mxu0
        %v1210 = vadd.f32 %v946, %v1209
        %1211 = vmatprep.mubr.bf16.mxu0 0
        %1212 = vmatmul.mubr.bf16.gmra.mrb[0].mxu0 %v776
        %v1213 = vpop.f32.mrb[0].mxu0
        %v1214 = vadd.f32 %v942, %v1213
        %v1215 = vpop.f32.mrb[0].mxu0
        %v1216 = vadd.f32 %v946, %v1215
        %v1217 = vpop.f32.mrb[0].mxu0
        %v1218 = vadd.f32 %v942, %v1217
        %v1219 = vpop.f32.mrb[0].mxu0
        %v1220 = vadd.f32 %v946, %v1219
        %1221 = vdwg.mxu0
        %v1222 = vpack.c.bf16 %v1068, %v1064
        %v1223 = vpack.c.bf16 %v1070, %v1066
        %v1224 = vpack.c.bf16 %v1078, %v1074
        %v1225 = vpack.c.bf16 %v1080, %v1076
        %v1226 = vpack.c.bf16 %v1088, %v1084
        %v1227 = vpack.c.bf16 %v1090, %v1086
        %v1228 = vpack.c.bf16 %v1098, %v1094
        %v1229 = vpack.c.bf16 %v1100, %v1096
        %v1230 = vpack.c.bf16 %v1108, %v1104
        %v1231 = vpack.c.bf16 %v1110, %v1106
        %v1232 = vpack.c.bf16 %v1118, %v1114
        %v1233 = vpack.c.bf16 %v1120, %v1116
        %v1234 = vpack.c.bf16 %v1128, %v1124
        %v1235 = vpack.c.bf16 %v1130, %v1126
        %v1236 = vpack.c.bf16 %v1138, %v1134
        %v1237 = vpack.c.bf16 %v1140, %v1136
        %v1238 = vpack.c.bf16 %v1148, %v1144
        %v1239 = vpack.c.bf16 %v1150, %v1146
        %v1240 = vpack.c.bf16 %v1158, %v1154
        %v1241 = vpack.c.bf16 %v1160, %v1156
        %v1242 = vpack.c.bf16 %v1168, %v1164
        %v1243 = vpack.c.bf16 %v1170, %v1166
        %v1244 = vpack.c.bf16 %v1178, %v1174
        %v1245 = vpack.c.bf16 %v1180, %v1176
        %v1246 = vpack.c.bf16 %v1188, %v1184
        %v1247 = vpack.c.bf16 %v1190, %v1186
        %v1248 = vpack.c.bf16 %v1198, %v1194
        %v1249 = vpack.c.bf16 %v1200, %v1196
        %v1250 = vpack.c.bf16 %v1208, %v1204
        %v1251 = vpack.c.bf16 %v1210, %v1206
        %v1252 = vpack.c.bf16 %v1218, %v1214
        %v1253 = vpack.c.bf16 %v1220, %v1216
        %v1286 = vunpack.c.l.b16 %v1222
        %v1287 = vunpack.c.l.b16 %v1223
        %v1288 = vunpack.c.h.b16 %v1222
        %v1289 = vunpack.c.h.b16 %v1223
        %v1290 = vunpack.c.l.b16 %v1224
        %v1291 = vunpack.c.l.b16 %v1225
        %v1292 = vunpack.c.h.b16 %v1224
        %v1293 = vunpack.c.h.b16 %v1225
        %v1294 = vunpack.c.l.b16 %v1226
        %v1295 = vunpack.c.l.b16 %v1227
        %v1296 = vunpack.c.h.b16 %v1226
        %v1297 = vunpack.c.h.b16 %v1227
        %v1298 = vunpack.c.l.b16 %v1228
        %v1299 = vunpack.c.l.b16 %v1229
        %v1300 = vunpack.c.h.b16 %v1228
        %v1301 = vunpack.c.h.b16 %v1229
        %v1302 = vunpack.c.l.b16 %v1230
        %v1303 = vunpack.c.l.b16 %v1231
        %v1304 = vunpack.c.h.b16 %v1230
        %v1305 = vunpack.c.h.b16 %v1231
        %v1306 = vunpack.c.l.b16 %v1232
        %v1307 = vunpack.c.l.b16 %v1233
        %v1308 = vunpack.c.h.b16 %v1232
        %v1309 = vunpack.c.h.b16 %v1233
        %v1310 = vunpack.c.l.b16 %v1234
        %v1311 = vunpack.c.l.b16 %v1235
        %v1312 = vunpack.c.h.b16 %v1234
        %v1313 = vunpack.c.h.b16 %v1235
        %v1314 = vunpack.c.l.b16 %v1236
        %v1315 = vunpack.c.l.b16 %v1237
        %v1316 = vunpack.c.h.b16 %v1236
        %v1317 = vunpack.c.h.b16 %v1237
        %v1318 = vunpack.c.l.b16 %v1238
        %v1319 = vunpack.c.l.b16 %v1239
        %v1320 = vunpack.c.h.b16 %v1238
        %v1321 = vunpack.c.h.b16 %v1239
        %v1322 = vunpack.c.l.b16 %v1240
        %v1323 = vunpack.c.l.b16 %v1241
        %v1324 = vunpack.c.h.b16 %v1240
        %v1325 = vunpack.c.h.b16 %v1241
        %v1326 = vunpack.c.l.b16 %v1242
        %v1327 = vunpack.c.l.b16 %v1243
        %v1328 = vunpack.c.h.b16 %v1242
        %v1329 = vunpack.c.h.b16 %v1243
        %v1330 = vunpack.c.l.b16 %v1244
        %v1331 = vunpack.c.l.b16 %v1245
        %v1332 = vunpack.c.h.b16 %v1244
        %v1333 = vunpack.c.h.b16 %v1245
        %v1334 = vunpack.c.l.b16 %v1246
        %v1335 = vunpack.c.l.b16 %v1247
        %v1336 = vunpack.c.h.b16 %v1246
        %v1337 = vunpack.c.h.b16 %v1247
        %v1338 = vunpack.c.l.b16 %v1248
        %v1339 = vunpack.c.l.b16 %v1249
        %v1340 = vunpack.c.h.b16 %v1248
        %v1341 = vunpack.c.h.b16 %v1249
        %v1342 = vunpack.c.l.b16 %v1250
        %v1343 = vunpack.c.l.b16 %v1251
        %v1344 = vunpack.c.h.b16 %v1250
        %v1345 = vunpack.c.h.b16 %v1251
        %v1346 = vunpack.c.l.b16 %v1252
        %v1347 = vunpack.c.l.b16 %v1253
        %v1348 = vunpack.c.h.b16 %v1252
        %v1349 = vunpack.c.h.b16 %v1253
        %v1350 = vpack.c.b16 %v1287, %v1286
        %v1351 = vpack.c.b16 %v1289, %v1288
        %v1352 = vpack.c.b16 %v1291, %v1290
        %v1353 = vpack.c.b16 %v1293, %v1292
        %v1354 = vpack.c.b16 %v1295, %v1294
        %v1355 = vpack.c.b16 %v1297, %v1296
        %v1356 = vpack.c.b16 %v1299, %v1298
        %v1357 = vpack.c.b16 %v1301, %v1300
        %v1358 = vpack.c.b16 %v1303, %v1302
        %v1359 = vpack.c.b16 %v1305, %v1304
        %v1360 = vpack.c.b16 %v1307, %v1306
        %v1361 = vpack.c.b16 %v1309, %v1308
        %v1362 = vpack.c.b16 %v1311, %v1310
        %v1363 = vpack.c.b16 %v1313, %v1312
        %v1364 = vpack.c.b16 %v1315, %v1314
        %v1365 = vpack.c.b16 %v1317, %v1316
        %v1366 = vpack.c.b16 %v1319, %v1318
        %v1367 = vpack.c.b16 %v1321, %v1320
        %v1368 = vpack.c.b16 %v1323, %v1322
        %v1369 = vpack.c.b16 %v1325, %v1324
        %v1370 = vpack.c.b16 %v1327, %v1326
        %v1371 = vpack.c.b16 %v1329, %v1328
        %v1372 = vpack.c.b16 %v1331, %v1330
        %v1373 = vpack.c.b16 %v1333, %v1332
        %v1374 = vpack.c.b16 %v1335, %v1334
        %v1375 = vpack.c.b16 %v1337, %v1336
        %v1376 = vpack.c.b16 %v1339, %v1338
        %v1377 = vpack.c.b16 %v1341, %v1340
        %v1378 = vpack.c.b16 %v1343, %v1342
        %v1379 = vpack.c.b16 %v1345, %v1344
        %v1380 = vpack.c.b16 %v1347, %v1346
        %v1381 = vpack.c.b16 %v1349, %v1348
        %1414 = vst [vmem:[%s340] sm:$0xff] %v1350
        %1415 = vst [vmem:[%s340 + $0x8] sm:$0xff] %v1351
        %1416 = vst [vmem:[%s340 + $0x10] sm:$0xff] %v1352
        %1417 = vst [vmem:[%s340 + $0x18] sm:$0xff] %v1353
        %1418 = vst [vmem:[%s340 + $0x20] sm:$0xff] %v1354
        %1419 = vst [vmem:[%s340 + $0x28] sm:$0xff] %v1355
        %1420 = vst [vmem:[%s340 + $0x30] sm:$0xff] %v1356
        %1421 = vst [vmem:[%s340 + $0x38] sm:$0xff] %v1357
        %1422 = vst [vmem:[%s340 + $0x40] sm:$0xff] %v1358
        %1423 = vst [vmem:[%s340 + $0x48] sm:$0xff] %v1359
        %1424 = vst [vmem:[%s340 + $0x50] sm:$0xff] %v1360
        %1425 = vst [vmem:[%s340 + $0x58] sm:$0xff] %v1361
        %1426 = vst [vmem:[%s340 + $0x60] sm:$0xff] %v1362
        %1427 = vst [vmem:[%s340 + $0x68] sm:$0xff] %v1363
        %1428 = vst [vmem:[%s340 + $0x70] sm:$0xff] %v1364
        %1429 = vst [vmem:[%s340 + $0x78] sm:$0xff] %v1365
        %1430 = vst [vmem:[%s340 + $0x80] sm:$0xff] %v1366
        %1431 = vst [vmem:[%s340 + $0x88] sm:$0xff] %v1367
        %1432 = vst [vmem:[%s340 + $0x90] sm:$0xff] %v1368
        %1433 = vst [vmem:[%s340 + $0x98] sm:$0xff] %v1369
        %1434 = vst [vmem:[%s340 + $0xa0] sm:$0xff] %v1370
        %1435 = vst [vmem:[%s340 + $0xa8] sm:$0xff] %v1371
        %1436 = vst [vmem:[%s340 + $0xb0] sm:$0xff] %v1372
        %1437 = vst [vmem:[%s340 + $0xb8] sm:$0xff] %v1373
        %1438 = vst [vmem:[%s340 + $0xc0] sm:$0xff] %v1374
        %1439 = vst [vmem:[%s340 + $0xc8] sm:$0xff] %v1375
        %1440 = vst [vmem:[%s340 + $0xd0] sm:$0xff] %v1376
        %1441 = vst [vmem:[%s340 + $0xd8] sm:$0xff] %v1377
        %1442 = vst [vmem:[%s340 + $0xe0] sm:$0xff] %v1378
        %1443 = vst [vmem:[%s340 + $0xe8] sm:$0xff] %v1379
        %1444 = vst [vmem:[%s340 + $0xf0] sm:$0xff] %v1380
        %1445 = vst [vmem:[%s340 + $0xf8] sm:$0xff] %v1381
        %s1446 = sand.u32 %s186, 1
        %s1447 = scalar_lea.sflag [#allocation4], %s1446
        %s1448 = sand.u32 %s186, 1
        %s1449 = smul.addr %s1448, 128
        %s1450 = scalar_lea.vmem [#allocation5], %s1449
        %s1451 = sand.u32 %s214, 1
        %s1452 = scalar_lea.sflag [#allocation7], %s1451
        %s1453 = sand.u32 %s214, 1
        %s1454 = smul.addr %s1453, 256
        %s1455 = scalar_lea.vmem [#allocation6], %s1454
        // Predicated region
        $region49: #{tpu_custom_call.1} parent=43 // pred_check
          %p1456 = pneg %p196
        $region50: #{tpu_custom_call.1} parent=43 // pred_check_branch
          %1458 = sbr.rel (%p1456) target = $region52
        $region51: #{tpu_custom_call.1} parent=43 // pred_region
          %s1459 = smul.u32 32, %s31
          %s1461 = ssub.s32 2048, 2048
          %1462 = vsyncadd %s1447, %s1461
          %s1463 = smul.addr %s30, 64
          %s1464 = sadd.s32 %s1459, %s1463
          %s1465 = smul.addr %s1464, 64
          %s1466 = scalar_lea.hbm %s6, %s1465
          %s1467 = sshll.u32 %s1450, 4
          %s1468 = int_to_ptr.vmem [resolvable:$true] %s1467
          %1473 = dma.vmem_to_hbm [thread:$0]  %s1468, 2048, %s1466, %s1447, 64, 64, 4
        $region52: #{tpu_custom_call.1} parent=43 // pred_fallthru
          _
        // Predicated region
        $region53: #{tpu_custom_call.1} parent=43 // pred_check
          %p1474 = pneg %p224
        $region54: #{tpu_custom_call.1} parent=43 // pred_check_branch
          %1476 = sbr.rel (%p1474) target = $region56
        $region55: #{tpu_custom_call.1} parent=43 // pred_region
          %s1477 = smul.u32 32, %s31
          %s1479 = ssub.s32 4096, 4096
          %1480 = vsyncadd %s1452, %s1479
          %s1481 = smul.addr %s1477, 2
          %s1482 = smul.addr %s30, 128
          %s1483 = sadd.s32 %s1481, %s1482
          %s1484 = smul.addr %s1483, 64
          %s1485 = scalar_lea.hbm %s7, %s1484
          %s1486 = sshll.u32 %s1455, 4
          %s1487 = int_to_ptr.vmem [resolvable:$true] %s1486
          %1492 = dma.vmem_to_hbm [thread:$0]  %s1487, 4096, %s1485, %s1452, 128, 128, 8
        $region56: #{tpu_custom_call.1} parent=43 // pred_fallthru
          _
      $region44: #{tpu_custom_call.1} parent=5 // pred_fallthru
        _
      %p1493 = scmp.le.s32.totalorder 2, %s21
      // Predicated region
      $region57: #{tpu_custom_call.1} parent=5 // pred_check
        %p1494 = pneg %p1493
      $region58: #{tpu_custom_call.1} parent=5 // pred_check_branch
        %1496 = sbr.rel (%p1494) target = $region60
      $region59: #{tpu_custom_call.1} parent=5 // pred_region
        %s1497 = ssub.s32 %s21, 2
        // Predicated region
        $region61: #{tpu_custom_call.1} parent=59 // pred_check
          %p1498 = pneg %p202
        $region62: #{tpu_custom_call.1} parent=59 // pred_check_branch
          %1500 = sbr.rel (%p1498) target = $region64
        $region63: #{tpu_custom_call.1} parent=59 // pred_region
          %s1501 = sand.u32 %s187, 1
          %s1502 = scalar_lea.sflag [#allocation4], %s1501
          %s1503 = sand.u32 %s187, 1
          %s1504 = smul.addr %s1503, 128
          %s1505 = scalar_lea.vmem [#allocation5], %s1504
          %1506 = dma.done %s1502, 2048
        $region64: #{tpu_custom_call.1} parent=59 // pred_fallthru
          _
        // Predicated region
        $region65: #{tpu_custom_call.1} parent=59 // pred_check
          %p1507 = pneg %p230
        $region66: #{tpu_custom_call.1} parent=59 // pred_check_branch
          %1509 = sbr.rel (%p1507) target = $region68
        $region67: #{tpu_custom_call.1} parent=59 // pred_region
          %s1510 = sand.u32 %s215, 1
          %s1511 = scalar_lea.sflag [#allocation7], %s1510
          %s1512 = sand.u32 %s215, 1
          %s1513 = smul.addr %s1512, 256
          %s1514 = scalar_lea.vmem [#allocation6], %s1513
          %1515 = dma.done %s1511, 4096
        $region68: #{tpu_custom_call.1} parent=59 // pred_fallthru
          _
      $region60: #{tpu_custom_call.1} parent=5 // pred_fallthru
        _
    $region6: #{tpu_custom_call.1} parent=1 // loop_footer
      %s25 = sadd.s32 1, %s21
    $region7: #{tpu_custom_call.1} parent=1 // loop_footer_branch
      %20 = sbr.rel target = $region3
    $region8: #{tpu_custom_call.1} parent=1 // loop_exit
      _
    %1516 = vsyncpa [#allocation3], 1
    %s1517 = scalar_lea.sflag [#allocation3], 1
    %1518 = vsyncpa %s1517, 1
    %1519 = vsyncpa [#allocation4], 1
    %s1520 = scalar_lea.sflag [#allocation4], 1
    %1521 = vsyncpa %s1520, 1
    %1522 = vsyncpa [#allocation7], 1
    %s1523 = scalar_lea.sflag [#allocation7], 1
    %1524 = vsyncpa %s1523, 1

// kernel: tpu_custom_call.1
$region0: #{tpu_custom_call.1}
  #allocation0 [shape = 'u32[]', space=smem, size = 0x4, offset = 0x4, fixed_abs, tag = 'smem constant byte address 0x4 - core index']
  #allocation1 [shape = 'u32[144,128]{1,0:T(1,128)}', space=vmem, size = 0x12000, scoped, tag = 'internal scratch']
  %s0 = inlined_call_operand.vmem [shape: bf16[2,512,16], index: 0, kind: input, shape index: {}]
  %s1 = inlined_call_operand.vmem [shape: bf16[16,128], index: 1, kind: input, shape index: {}]
  %s2 = inlined_call_operand.vmem [shape: f32[1,128], index: 2, kind: input, shape index: {}]
  %s3 = inlined_call_operand.vmem [shape: f32[512,128], index: 3, kind: input, shape index: {}]
  %s4 = inlined_call_operand.hbm [shape: bf16[128,256], index: 4, kind: input, shape index: {}]
  %s5 = inlined_call_operand.vmem [shape: f32[1,256], index: 5, kind: input, shape index: {}]
  %s6 = inlined_call_operand.hbm [shape: bf16[2,512,128], index: 6, kind: output, shape index: {0}]
  %s7 = inlined_call_operand.hbm [shape: bf16[2,512,256], index: 7, kind: output, shape index: {1}]
  %8 = xla_tuple %s6, %s7
  %s9 = sld [smem:[#allocation0]]
  $region69: #{tpu_custom_call.1} parent=0
    _
  %s11 = ssub.s32 1, %s9
  %s12 = scalar_select 0, %s11, %s9
  $region1: #{tpu_custom_call.1} parent=0
    #allocation2 [shape = 'u8[65536]{0}', space=vmem, size = 0x10000, scoped, tag = 'input window, operand 4, single buffered']
    #allocation3 [shape = 's32[2]{0}', space=sflag, size = 0x8, scoped, tag = 'scoped memory for tpu_custom_call.1']
    #allocation4 [shape = 's32[2]{0}', space=sflag, size = 0x8, scoped, tag = 'scoped memory for tpu_custom_call.1']
    #allocation5 [shape = 'u8[131072]{0}', space=vmem, size = 0x20000, scoped, tag = 'output window, operand 0']
    #allocation6 [shape = 'u8[262144]{0}', space=vmem, size = 0x40000, scoped, tag = 'output window, operand 1']
    #allocation7 [shape = 's32[2]{0}', space=sflag, size = 0x8, scoped, tag = 'scoped memory for tpu_custom_call.1']
    %13 = vsyncpa [#allocation3], 0
    %14 = vsyncpa [#allocation4], 0
    %s15 = scalar_lea.sflag [#allocation4], 1
    %16 = vsyncpa %s15, 0
    %17 = vsyncpa [#allocation7], 0
    %s18 = scalar_lea.sflag [#allocation7], 1
    %19 = vsyncpa %s18, 0
    loop: start=0, step=1, limit=6
    $region2: #{tpu_custom_call.1} parent=1 // loop_pre_header
      _
    $region3: #{tpu_custom_call.1} parent=1 // loop_header
      %s21 = sphi 0, %s25
      %p22 = scmp.ge.s32.totalorder %s21, 6
      %s28 = sphi 0, %s40
      %s29 = sphi 0, %s36
      %s30 = sphi 0, %s28
      %s31 = sphi 0, %s29
      %s32 = sphi 0, %s30
      %s33 = sphi 0, %s31
      %s45 = sphi 0, %s47
      %s48 = sphi 0, %s45
      %s49 = sphi 0, %s48
      %s65 = sphi 0, %s49
      %s69 = sphi 0, %s69
      %s71 = sphi 0, %s69
      %s72 = sphi 0, %s71
      %s86 = sphi 0, %s72
      %s90 = sphi 0, %s90
      %s92 = sphi 0, %s90
      %s93 = sphi 0, %s92
      %s107 = sphi 0, %s93
      %s113 = sphi 0, %s115
      %s116 = sphi 0, %s113
      %s117 = sphi 0, %s116
      %s133 = sphi 0, %s117
      %s137 = sphi 0, %s137
      %s139 = sphi 0, %s137
      %s140 = sphi 0, %s139
      %s154 = sphi 0, %s140
      %s158 = sphi 0, %s158
      %s160 = sphi 0, %s158
      %s161 = sphi 0, %s160
      %s175 = sphi 0, %s161
      %s183 = sphi 0, %s185
      %s186 = sphi 0, %s183
      %s187 = sphi 0, %s186
      %s203 = sphi 0, %s187
      %s211 = sphi 0, %s213
      %s214 = sphi 0, %s211
      %s215 = sphi 0, %s214
      %s231 = sphi 0, %s215
    $region4: #{tpu_custom_call.1} parent=1 // loop_header_branch
      %24 = sbr.rel (%p22) target = $region8
    $region5: #{tpu_custom_call.1} parent=1 // loop_body
      %s26 = ssub.s32 %s21, 1
      %s27 = ssub.s32 %s21, 2
      %s34 = sadd.s32 1, %s29
      %p35 = scmp.ge.s32.totalorder %s34, 2
      %s36 = scalar_select %p35, 0, %s34
      %s37 = sadd.s32 1, %s28
      %s38 = scalar_select %p35, %s37, %s28
      %p39 = scmp.ge.s32.totalorder %s38, 2
      %s40 = scalar_select %p39, 0, %s38
      %s41 = ssub.s32 %s28, %s40
      %s42 = ssub.s32 %s29, %s36
      %s43 = sor.u32 %s41, %s42
      %p44 = scmp.eq.s32.totalorder %s43, 0
      %s46 = sadd.s32 %s45, 1
      %s47 = scalar_select %p44, %s45, %s46
      %p50 = pneg %p44
      %p51 = scmp.eq.s32.totalorder %s21, 3
      %p52 = por %p50, %p51
      %p53 = scmp.ne.s32.totalorder %s45, %s48
      %p54 = scmp.eq.s32.totalorder %s21, 0
      %p55 = por %p53, %p54
      %p56 = scmp.ne.s32.totalorder %s45, %s48
      %p57 = scmp.eq.s32.totalorder %s26, 3
      %p58 = por %p56, %p57
      %p59 = scmp.ne.s32.totalorder %s48, %s49
      %p60 = scmp.eq.s32.totalorder %s26, 0
      %p61 = por %p59, %p60
      %p62 = scmp.ne.s32.totalorder %s48, %s49
      %p63 = scmp.eq.s32.totalorder %s27, 3
      %p64 = por %p62, %p63
      %p66 = scmp.ne.s32.totalorder %s49, %s65
      %p67 = scmp.eq.s32.totalorder %s27, 0
      %p68 = por %p66, %p67
      %s70 = sadd.s32 %s69, 1
      %p73 = scmp.eq.s32.totalorder %s21, 3
      %p74 = scmp.ne.s32.totalorder %s69, %s71
      %p75 = scmp.eq.s32.totalorder %s21, 0
      %p76 = por %p74, %p75
      %p77 = scmp.ne.s32.totalorder %s69, %s71
      %p78 = scmp.eq.s32.totalorder %s26, 3
      %p79 = por %p77, %p78
      %p80 = scmp.ne.s32.totalorder %s71, %s72
      %p81 = scmp.eq.s32.totalorder %s26, 0
      %p82 = por %p80, %p81
      %p83 = scmp.ne.s32.totalorder %s71, %s72
      %p84 = scmp.eq.s32.totalorder %s27, 3
      %p85 = por %p83, %p84
      %p87 = scmp.ne.s32.totalorder %s72, %s86
      %p88 = scmp.eq.s32.totalorder %s27, 0
      %p89 = por %p87, %p88
      %s91 = sadd.s32 %s90, 1
      %p94 = scmp.eq.s32.totalorder %s21, 3
      %p95 = scmp.ne.s32.totalorder %s90, %s92
      %p96 = scmp.eq.s32.totalorder %s21, 0
      %p97 = por %p95, %p96
      %p98 = scmp.ne.s32.totalorder %s90, %s92
      %p99 = scmp.eq.s32.totalorder %s26, 3
      %p100 = por %p98, %p99
      %p101 = scmp.ne.s32.totalorder %s92, %s93
      %p102 = scmp.eq.s32.totalorder %s26, 0
      %p103 = por %p101, %p102
      %p104 = scmp.ne.s32.totalorder %s92, %s93
      %p105 = scmp.eq.s32.totalorder %s27, 3
      %p106 = por %p104, %p105
      %p108 = scmp.ne.s32.totalorder %s93, %s107
      %p109 = scmp.eq.s32.totalorder %s27, 0
      %p110 = por %p108, %p109
      %s111 = ssub.s32 %s29, %s36
      %p112 = scmp.eq.s32.totalorder %s111, 0
      %s114 = sadd.s32 %s113, 1
      %s115 = scalar_select %p112, %s113, %s114
      %p118 = pneg %p112
      %p119 = scmp.eq.s32.totalorder %s21, 3
      %p120 = por %p118, %p119
      %p121 = scmp.ne.s32.totalorder %s113, %s116
      %p122 = scmp.eq.s32.totalorder %s21, 0
      %p123 = por %p121, %p122
      %p124 = scmp.ne.s32.totalorder %s113, %s116
      %p125 = scmp.eq.s32.totalorder %s26, 3
      %p126 = por %p124, %p125
      %p127 = scmp.ne.s32.totalorder %s116, %s117
      %p128 = scmp.eq.s32.totalorder %s26, 0
      %p129 = por %p127, %p128
      %p130 = scmp.ne.s32.totalorder %s116, %s117
      %p131 = scmp.eq.s32.totalorder %s27, 3
      %p132 = por %p130, %p131
      %p134 = scmp.ne.s32.totalorder %s117, %s133
      %p135 = scmp.eq.s32.totalorder %s27, 0
      %p136 = por %p134, %p135
      %s138 = sadd.s32 %s137, 1
      %p141 = scmp.eq.s32.totalorder %s21, 3
      %p142 = scmp.ne.s32.totalorder %s137, %s139
      %p143 = scmp.eq.s32.totalorder %s21, 0
      %p144 = por %p142, %p143
      %p145 = scmp.ne.s32.totalorder %s137, %s139
      %p146 = scmp.eq.s32.totalorder %s26, 3
      %p147 = por %p145, %p146
      %p148 = scmp.ne.s32.totalorder %s139, %s140
      %p149 = scmp.eq.s32.totalorder %s26, 0
      %p150 = por %p148, %p149
      %p151 = scmp.ne.s32.totalorder %s139, %s140
      %p152 = scmp.eq.s32.totalorder %s27, 3
      %p153 = por %p151, %p152
      %p155 = scmp.ne.s32.totalorder %s140, %s154
      %p156 = scmp.eq.s32.totalorder %s27, 0
      %p157 = por %p155, %p156
      %s159 = sadd.s32 %s158, 1
      %p162 = scmp.eq.s32.totalorder %s21, 3
      %p163 = scmp.ne.s32.totalorder %s158, %s160
      %p164 = scmp.eq.s32.totalorder %s21, 0
      %p165 = por %p163, %p164
      %p166 = scmp.ne.s32.totalorder %s158, %s160
      %p167 = scmp.eq.s32.totalorder %s26, 3
      %p168 = por %p166, %p167
      %p169 = scmp.ne.s32.totalorder %s160, %s161
      %p170 = scmp.eq.s32.totalorder %s26, 0
      %p171 = por %p169, %p170
      %p172 = scmp.ne.s32.totalorder %s160, %s161
      %p173 = scmp.eq.s32.totalorder %s27, 3
      %p174 = por %p172, %p173
      %p176 = scmp.ne.s32.totalorder %s161, %s175
      %p177 = scmp.eq.s32.totalorder %s27, 0
      %p178 = por %p176, %p177
      %s179 = ssub.s32 %s28, %s40
      %s180 = ssub.s32 %s29, %s36
      %s181 = sor.u32 %s179, %s180
      %p182 = scmp.eq.s32.totalorder %s181, 0
      %s184 = sadd.s32 %s183, 1
      %s185 = scalar_select %p182, %s183, %s184
      %p188 = pneg %p182
      %p189 = scmp.eq.s32.totalorder %s21, 3
      %p190 = por %p188, %p189
      %p191 = scmp.ne.s32.totalorder %s183, %s186
      %p192 = scmp.eq.s32.totalorder %s21, 0
      %p193 = por %p191, %p192
      %p194 = scmp.ne.s32.totalorder %s183, %s186
      %p195 = scmp.eq.s32.totalorder %s26, 3
      %p196 = por %p194, %p195
      %p197 = scmp.ne.s32.totalorder %s186, %s187
      %p198 = scmp.eq.s32.totalorder %s26, 0
      %p199 = por %p197, %p198
      %p200 = scmp.ne.s32.totalorder %s186, %s187
      %p201 = scmp.eq.s32.totalorder %s27, 3
      %p202 = por %p200, %p201
      %p204 = scmp.ne.s32.totalorder %s187, %s203
      %p205 = scmp.eq.s32.totalorder %s27, 0
      %p206 = por %p204, %p205
      %s207 = ssub.s32 %s28, %s40
      %s208 = ssub.s32 %s29, %s36
      %s209 = sor.u32 %s207, %s208
      %p210 = scmp.eq.s32.totalorder %s209, 0
      %s212 = sadd.s32 %s211, 1
      %s213 = scalar_select %p210, %s211, %s212
      %p216 = pneg %p210
      %p217 = scmp.eq.s32.totalorder %s21, 3
      %p218 = por %p216, %p217
      %p219 = scmp.ne.s32.totalorder %s211, %s214
      %p220 = scmp.eq.s32.totalorder %s21, 0
      %p221 = por %p219, %p220
      %p222 = scmp.ne.s32.totalorder %s211, %s214
      %p223 = scmp.eq.s32.totalorder %s26, 3
      %p224 = por %p222, %p223
      %p225 = scmp.ne.s32.totalorder %s214, %s215
      %p226 = scmp.eq.s32.totalorder %s26, 0
      %p227 = por %p225, %p226
      %p228 = scmp.ne.s32.totalorder %s214, %s215
      %p229 = scmp.eq.s32.totalorder %s27, 3
      %p230 = por %p228, %p229
      %p232 = scmp.ne.s32.totalorder %s215, %s231
      %p233 = scmp.eq.s32.totalorder %s27, 0
      %p234 = por %p232, %p233
      %p235 = scmp.le.s32.totalorder 1, %s21
      %p236 = scmp.lt.s32.totalorder %s21, 5
      %p237 = pnand %p235, %p236
      %p238 = pneg %p237
      // Predicated region
      $region9: #{tpu_custom_call.1} parent=5 // pred_check
        _
      $region10: #{tpu_custom_call.1} parent=5 // pred_check_branch
        %240 = sbr.rel (%p237) target = $region12
      $region11: #{tpu_custom_call.1} parent=5 // pred_region
        %s241 = ssub.s32 %s21, 1
        // Predicated region
        $region13: #{tpu_custom_call.1} parent=11 // pred_check
          %p242 = pneg %p82
        $region14: #{tpu_custom_call.1} parent=11 // pred_check_branch
          %244 = sbr.rel (%p242) target = $region16
        $region15: #{tpu_custom_call.1} parent=11 // pred_region
          _
        $region16: #{tpu_custom_call.1} parent=11 // pred_fallthru
          _
        // Predicated region
        $region17: #{tpu_custom_call.1} parent=11 // pred_check
          %p245 = pneg %p103
        $region18: #{tpu_custom_call.1} parent=11 // pred_check_branch
          %247 = sbr.rel (%p245) target = $region20
        $region19: #{tpu_custom_call.1} parent=11 // pred_region
          _
        $region20: #{tpu_custom_call.1} parent=11 // pred_fallthru
          _
        // Predicated region
        $region21: #{tpu_custom_call.1} parent=11 // pred_check
          %p248 = pneg %p150
        $region22: #{tpu_custom_call.1} parent=11 // pred_check_branch
          %250 = sbr.rel (%p248) target = $region24
        $region23: #{tpu_custom_call.1} parent=11 // pred_region
          %s252 = ssub.s32 2048, 2048
          %253 = vsyncadd [#allocation3], %s252
          %s254 = sshll.u32 [#allocation2], 4
          %s255 = int_to_ptr.vmem [resolvable:$true] %s254
          %260 = dma.hbm_to_vmem [thread:$0]  %s4, 2048, %s255, [#allocation3], 128, 128, 8
        $region24: #{tpu_custom_call.1} parent=11 // pred_fallthru
          _
        // Predicated region
        $region25: #{tpu_custom_call.1} parent=11 // pred_check
          %p261 = pneg %p171
        $region26: #{tpu_custom_call.1} parent=11 // pred_check_branch
          %263 = sbr.rel (%p261) target = $region28
        $region27: #{tpu_custom_call.1} parent=11 // pred_region
          _
        $region28: #{tpu_custom_call.1} parent=11 // pred_fallthru
          _
      $region12: #{tpu_custom_call.1} parent=5 // pred_fallthru
        _
      %p264 = scmp.lt.s32.totalorder %s21, 4
      // Predicated region
      $region29: #{tpu_custom_call.1} parent=5 // pred_check
        %p265 = pneg %p264
      $region30: #{tpu_custom_call.1} parent=5 // pred_check_branch
        %267 = sbr.rel (%p265) target = $region32
      $region31: #{tpu_custom_call.1} parent=5 // pred_region
        // Predicated region
        $region33: #{tpu_custom_call.1} parent=31 // pred_check
          %p268 = pneg %p55
        $region34: #{tpu_custom_call.1} parent=31 // pred_check_branch
          %270 = sbr.rel (%p268) target = $region36
        $region35: #{tpu_custom_call.1} parent=31 // pred_region
          %s271 = smul.u32 32, %s29
          %p272 = scmp.lt.s32.totalorder %s28, 1
          %s273 = scalar_select %p272, %s28, 1
          %p274 = scmp.lt.s32.totalorder %s271, 63
          %s275 = scalar_select %p274, %s271, 63
          %s276 = smul.addr %s273, 64
          %s277 = sadd.s32 %s275, %s276
          %s278 = smul.addr %s277, 4
          %s279 = scalar_lea.vmem %s0, %s278
          %s280 = smul.u32 32, %s29
        $region36: #{tpu_custom_call.1} parent=31 // pred_fallthru
          _
        // Predicated region
        $region37: #{tpu_custom_call.1} parent=31 // pred_check
          %p281 = pneg %p123
        $region38: #{tpu_custom_call.1} parent=31 // pred_check_branch
          %283 = sbr.rel (%p281) target = $region40
        $region39: #{tpu_custom_call.1} parent=31 // pred_region
          %s284 = smul.u32 32, %s29
          %p285 = scmp.lt.s32.totalorder %s284, 63
          %s286 = scalar_select %p285, %s284, 63
          %s287 = smul.addr %s286, 8
          %s288 = scalar_lea.vmem %s3, %s287
          %s289 = smul.u32 32, %s29
        $region40: #{tpu_custom_call.1} parent=31 // pred_fallthru
          _
      $region32: #{tpu_custom_call.1} parent=5 // pred_fallthru
        _
      %p290 = scmp.le.s32.totalorder 1, %s21
      %p291 = scmp.lt.s32.totalorder %s21, 5
      %p292 = pnand %p290, %p291
      %p293 = pneg %p292
      // Predicated region
      $region41: #{tpu_custom_call.1} parent=5 // pred_check
        _
      $region42: #{tpu_custom_call.1} parent=5 // pred_check_branch
        %295 = sbr.rel (%p292) target = $region44
      $region43: #{tpu_custom_call.1} parent=5 // pred_region
        %s296 = ssub.s32 %s21, 1
        // Predicated region
        $region45: #{tpu_custom_call.1} parent=43 // pred_check
          %p297 = pneg %p150
        $region46: #{tpu_custom_call.1} parent=43 // pred_check_branch
          %299 = sbr.rel (%p297) target = $region48
        $region47: #{tpu_custom_call.1} parent=43 // pred_region
          %300 = dma.done [#allocation3], 2048
        $region48: #{tpu_custom_call.1} parent=43 // pred_fallthru
          _
        %s301 = smul.u32 32, %s31
        %p302 = scmp.lt.s32.totalorder %s30, 1
        %s303 = scalar_select %p302, %s30, 1
        %p304 = scmp.lt.s32.totalorder %s301, 63
        %s305 = scalar_select %p304, %s301, 63
        %s306 = smul.addr %s303, 64
        %s307 = sadd.s32 %s305, %s306
        %s308 = smul.addr %s307, 4
        %s309 = scalar_lea.vmem %s0, %s308
        %p310 = pneg %p61
        %p311 = pneg %p58
        %p312 = pneg %p82
        %p313 = pneg %p79
        %p314 = pneg %p103
        %p315 = pneg %p100
        %s316 = smul.u32 32, %s31
        %p317 = scmp.lt.s32.totalorder %s316, 63
        %s318 = scalar_select %p317, %s316, 63
        %s319 = smul.addr %s318, 8
        %s320 = scalar_lea.vmem %s3, %s319
        %p321 = pneg %p129
        %p322 = pneg %p126
        %p323 = pneg %p150
        %p324 = pneg %p147
        %p325 = pneg %p171
        %p326 = pneg %p168
        %p327 = pneg %p199
        %p328 = pneg %p196
        %s329 = sand.u32 %s186, 1
        %s330 = scalar_lea.sflag [#allocation4], %s329
        %s331 = sand.u32 %s186, 1
        %s332 = smul.addr %s331, 128
        %s333 = scalar_lea.vmem [#allocation5], %s332
        %p334 = pneg %p227
        %p335 = pneg %p224
        %s336 = sand.u32 %s214, 1
        %s337 = scalar_lea.sflag [#allocation7], %s336
        %s338 = sand.u32 %s214, 1
        %s339 = smul.addr %s338, 256
        %s340 = scalar_lea.vmem [#allocation6], %s339
        %s341 = smul.u32 32, %s31
        %p342 = scmp.lt.s32.totalorder %s30, 1
        %s343 = scalar_select %p342, %s30, 1
        %p344 = scmp.lt.s32.totalorder %s341, 63
        %s345 = scalar_select %p344, %s341, 63
        %s346 = smul.addr %s343, 64
        %s347 = sadd.s32 %s345, %s346
        %s348 = smul.addr %s347, 4
        %s349 = scalar_lea.vmem %s0, %s348
        %s350 = smul.u32 32, %s31
        %s351 = smul.u32 32, %s31
        %p352 = scmp.lt.s32.totalorder %s351, 63
        %s353 = scalar_select %p352, %s351, 63
        %s354 = smul.addr %s353, 8
        %s355 = scalar_lea.vmem %s3, %s354
        %s356 = smul.u32 32, %s31
        %s357 = smul.u32 32, %s31
        %s358 = smul.u32 32, %s31
        %v360 = vld [vmem:[%s349] sm:$0xf]
        %v361 = vld [vmem:[%s349 + $0x4] sm:$0xf]
        %v362 = vld [vmem:[%s349 + $0x8] sm:$0xf]
        %v363 = vld [vmem:[%s349 + $0xc] sm:$0xf]
        %v364 = vld [vmem:[%s349 + $0x10] sm:$0xf]
        %v365 = vld [vmem:[%s349 + $0x14] sm:$0xf]
        %v366 = vld [vmem:[%s349 + $0x18] sm:$0xf]
        %v367 = vld [vmem:[%s349 + $0x1c] sm:$0xf]
        %v368 = vld [vmem:[%s349 + $0x20] sm:$0xf]
        %v369 = vld [vmem:[%s349 + $0x24] sm:$0xf]
        %v370 = vld [vmem:[%s349 + $0x28] sm:$0xf]
        %v371 = vld [vmem:[%s349 + $0x2c] sm:$0xf]
        %v372 = vld [vmem:[%s349 + $0x30] sm:$0xf]
        %v373 = vld [vmem:[%s349 + $0x34] sm:$0xf]
        %v374 = vld [vmem:[%s349 + $0x38] sm:$0xf]
        %v375 = vld [vmem:[%s349 + $0x3c] sm:$0xf]
        %v376 = vld [vmem:[%s349 + $0x40] sm:$0xf]
        %v377 = vld [vmem:[%s349 + $0x44] sm:$0xf]
        %v378 = vld [vmem:[%s349 + $0x48] sm:$0xf]
        %v379 = vld [vmem:[%s349 + $0x4c] sm:$0xf]
        %v380 = vld [vmem:[%s349 + $0x50] sm:$0xf]
        %v381 = vld [vmem:[%s349 + $0x54] sm:$0xf]
        %v382 = vld [vmem:[%s349 + $0x58] sm:$0xf]
        %v383 = vld [vmem:[%s349 + $0x5c] sm:$0xf]
        %v384 = vld [vmem:[%s349 + $0x60] sm:$0xf]
        %v385 = vld [vmem:[%s349 + $0x64] sm:$0xf]
        %v386 = vld [vmem:[%s349 + $0x68] sm:$0xf]
        %v387 = vld [vmem:[%s349 + $0x6c] sm:$0xf]
        %v388 = vld [vmem:[%s349 + $0x70] sm:$0xf]
        %v389 = vld [vmem:[%s349 + $0x74] sm:$0xf]
        %v390 = vld [vmem:[%s349 + $0x78] sm:$0xf]
        %v391 = vld [vmem:[%s349 + $0x7c] sm:$0xf]
        %v392 = vld [vmem:[%s1] sm:$0xf]
        %v393 = vld [vmem:[%s1 + $0x4] sm:$0xf]
        %v394 = vld [vmem:[%s2] sm:$0x1]
        %v396 = vlaneseq
        %v397 = vshrl.u32 %v396, 7
        %v398 = vsub.s32 0, %v397
        %v399 = vrot.slane %v394, %v398
        %v433 = vunpack.c.l.b16 %v360
        %v434 = vunpack.c.l.b16 %v361
        %v435 = vunpack.c.l.b16 %v362
        %v436 = vunpack.c.l.b16 %v363
        %v437 = vunpack.c.l.b16 %v364
        %v438 = vunpack.c.l.b16 %v365
        %v439 = vunpack.c.l.b16 %v366
        %v440 = vunpack.c.l.b16 %v367
        %v441 = vunpack.c.l.b16 %v368
        %v442 = vunpack.c.l.b16 %v369
        %v443 = vunpack.c.l.b16 %v370
        %v444 = vunpack.c.l.b16 %v371
        %v445 = vunpack.c.l.b16 %v372
        %v446 = vunpack.c.l.b16 %v373
        %v447 = vunpack.c.l.b16 %v374
        %v448 = vunpack.c.l.b16 %v375
        %v449 = vunpack.c.l.b16 %v376
        %v450 = vunpack.c.l.b16 %v377
        %v451 = vunpack.c.l.b16 %v378
        %v452 = vunpack.c.l.b16 %v379
        %v453 = vunpack.c.l.b16 %v380
        %v454 = vunpack.c.l.b16 %v381
        %v455 = vunpack.c.l.b16 %v382
        %v456 = vunpack.c.l.b16 %v383
        %v457 = vunpack.c.l.b16 %v384
        %v458 = vunpack.c.l.b16 %v385
        %v459 = vunpack.c.l.b16 %v386
        %v460 = vunpack.c.l.b16 %v387
        %v461 = vunpack.c.l.b16 %v388
        %v462 = vunpack.c.l.b16 %v389
        %v463 = vunpack.c.l.b16 %v390
        %v464 = vunpack.c.l.b16 %v391
        %v465 = vpack.c.b16 %v434, %v433
        %v466 = vpack.c.b16 %v436, %v435
        %v467 = vpack.c.b16 %v438, %v437
        %v468 = vpack.c.b16 %v440, %v439
        %v469 = vpack.c.b16 %v442, %v441
        %v470 = vpack.c.b16 %v444, %v443
        %v471 = vpack.c.b16 %v446, %v445
        %v472 = vpack.c.b16 %v448, %v447
        %v473 = vpack.c.b16 %v450, %v449
        %v474 = vpack.c.b16 %v452, %v451
        %v475 = vpack.c.b16 %v454, %v453
        %v476 = vpack.c.b16 %v456, %v455
        %v477 = vpack.c.b16 %v458, %v457
        %v478 = vpack.c.b16 %v460, %v459
        %v479 = vpack.c.b16 %v462, %v461
        %v480 = vpack.c.b16 %v464, %v463
        %v483 = vunpack.c.l.b16 %v392
        %v484 = vunpack.c.l.b16 %v393
        %v485 = vpack.c.b16 %v484, %v483
        %vm487 = vcmask 130048
        %v489 = vsel %vm487, %v465, 0
        %v492 = vsel %vm487, %v466, 0
        %v495 = vsel %vm487, %v467, 0
        %v498 = vsel %vm487, %v468, 0
        %v501 = vsel %vm487, %v469, 0
        %v504 = vsel %vm487, %v470, 0
        %v507 = vsel %vm487, %v471, 0
        %v510 = vsel %vm487, %v472, 0
        %v513 = vsel %vm487, %v473, 0
        %v516 = vsel %vm487, %v474, 0
        %v519 = vsel %vm487, %v475, 0
        %v522 = vsel %vm487, %v476, 0
        %v525 = vsel %vm487, %v477, 0
        %v528 = vsel %vm487, %v478, 0
        %v531 = vsel %vm487, %v479, 0
        %v534 = vsel %vm487, %v480, 0
        %536 = vmatprep.subr.bf16.mxu0 0
        %537 = vmatpush1.bf16.msra.mxu0 %v485
        %538 = vmatprep.subr.bf16.mxu0 0
        %539 = vmatpush1.bf16.msra.mxu0 0
        %540 = vmatprep.subr.bf16.mxu0 0
        %541 = vmatpush1.bf16.msra.mxu0 0
        %542 = vmatprep.subr.bf16.mxu0 0
        %543 = vmatpush1.bf16.msra.mxu0 0
        %544 = vmatprep.subr.bf16.mxu0 0
        %545 = vmatpush1.bf16.msra.mxu0 0
        %546 = vmatprep.subr.bf16.mxu0 0
        %547 = vmatpush1.bf16.msra.mxu0 0
        %548 = vmatprep.subr.bf16.mxu0 0
        %549 = vmatpush1.bf16.msra.mxu0 0
        %550 = vmatprep.subr.bf16.mxu0 0
        %551 = vmatpush1.bf16.msra.mxu0 0
        %552 = vmatprep.subr.bf16.mxu0 0
        %553 = vmatpush1.bf16.msra.mxu0 0
        %554 = vmatprep.subr.bf16.mxu0 0
        %555 = vmatpush1.bf16.msra.mxu0 0
        %556 = vmatprep.subr.bf16.mxu0 0
        %557 = vmatpush1.bf16.msra.mxu0 0
        %558 = vmatprep.subr.bf16.mxu0 0
        %559 = vmatpush1.bf16.msra.mxu0 0
        %560 = vmatprep.subr.bf16.mxu0 0
        %561 = vmatpush1.bf16.msra.mxu0 0
        %562 = vmatprep.subr.bf16.mxu0 0
        %563 = vmatpush1.bf16.msra.mxu0 0
        %564 = vmatprep.subr.bf16.mxu0 0
        %565 = vmatpush1.bf16.msra.mxu0 0
        %566 = vmatprep.subr.bf16.mxu0 0
        %567 = vmatpush1.bf16.msra.mxu0 0
        %568 = vmatprep.mubr.bf16.mxu0 0
        %569 = vmatmul.mubr.bf16.gmra.mrb[0].mxu0 %v489
        %v570 = vpop.f32.mrb[0].mxu0
        %v571 = vadd.f32 %v399, %v570
        %v572 = vpop.f32.mrb[0].mxu0
        %v573 = vpop.f32.mrb[0].mxu0
        %v574 = vadd.f32 %v399, %v573
        %v575 = vpop.f32.mrb[0].mxu0
        %576 = vmatprep.mubr.bf16.mxu0 0
        %577 = vmatmul.mubr.bf16.gmra.mrb[0].mxu0 %v492
        %v578 = vpop.f32.mrb[0].mxu0
        %v579 = vadd.f32 %v399, %v578
        %v580 = vpop.f32.mrb[0].mxu0
        %v581 = vpop.f32.mrb[0].mxu0
        %v582 = vadd.f32 %v399, %v581
        %v583 = vpop.f32.mrb[0].mxu0
        %584 = vmatprep.mubr.bf16.mxu0 0
        %585 = vmatmul.mubr.bf16.gmra.mrb[0].mxu0 %v495
        %v586 = vpop.f32.mrb[0].mxu0
        %v587 = vadd.f32 %v399, %v586
        %v588 = vpop.f32.mrb[0].mxu0
        %v589 = vpop.f32.mrb[0].mxu0
        %v590 = vadd.f32 %v399, %v589
        %v591 = vpop.f32.mrb[0].mxu0
        %592 = vmatprep.mubr.bf16.mxu0 0
        %593 = vmatmul.mubr.bf16.gmra.mrb[0].mxu0 %v498
        %v594 = vpop.f32.mrb[0].mxu0
        %v595 = vadd.f32 %v399, %v594
        %v596 = vpop.f32.mrb[0].mxu0
        %v597 = vpop.f32.mrb[0].mxu0
        %v598 = vadd.f32 %v399, %v597
        %v599 = vpop.f32.mrb[0].mxu0
        %600 = vmatprep.mubr.bf16.mxu0 0
        %601 = vmatmul.mubr.bf16.gmra.mrb[0].mxu0 %v501
        %v602 = vpop.f32.mrb[0].mxu0
        %v603 = vadd.f32 %v399, %v602
        %v604 = vpop.f32.mrb[0].mxu0
        %v605 = vpop.f32.mrb[0].mxu0
        %v606 = vadd.f32 %v399, %v605
        %v607 = vpop.f32.mrb[0].mxu0
        %608 = vmatprep.mubr.bf16.mxu0 0
        %609 = vmatmul.mubr.bf16.gmra.mrb[0].mxu0 %v504
        %v610 = vpop.f32.mrb[0].mxu0
        %v611 = vadd.f32 %v399, %v610
        %v612 = vpop.f32.mrb[0].mxu0
        %v613 = vpop.f32.mrb[0].mxu0
        %v614 = vadd.f32 %v399, %v613
        %v615 = vpop.f32.mrb[0].mxu0
        %616 = vmatprep.mubr.bf16.mxu0 0
        %617 = vmatmul.mubr.bf16.gmra.mrb[0].mxu0 %v507
        %v618 = vpop.f32.mrb[0].mxu0
        %v619 = vadd.f32 %v399, %v618
        %v620 = vpop.f32.mrb[0].mxu0
        %v621 = vpop.f32.mrb[0].mxu0
        %v622 = vadd.f32 %v399, %v621
        %v623 = vpop.f32.mrb[0].mxu0
        %624 = vmatprep.mubr.bf16.mxu0 0
        %625 = vmatmul.mubr.bf16.gmra.mrb[0].mxu0 %v510
        %v626 = vpop.f32.mrb[0].mxu0
        %v627 = vadd.f32 %v399, %v626
        %v628 = vpop.f32.mrb[0].mxu0
        %v629 = vpop.f32.mrb[0].mxu0
        %v630 = vadd.f32 %v399, %v629
        %v631 = vpop.f32.mrb[0].mxu0
        %632 = vmatprep.mubr.bf16.mxu0 0
        %633 = vmatmul.mubr.bf16.gmra.mrb[0].mxu0 %v513
        %v634 = vpop.f32.mrb[0].mxu0
        %v635 = vadd.f32 %v399, %v634
        %v636 = vpop.f32.mrb[0].mxu0
        %v637 = vpop.f32.mrb[0].mxu0
        %v638 = vadd.f32 %v399, %v637
        %v639 = vpop.f32.mrb[0].mxu0
        %640 = vmatprep.mubr.bf16.mxu0 0
        %641 = vmatmul.mubr.bf16.gmra.mrb[0].mxu0 %v516
        %v642 = vpop.f32.mrb[0].mxu0
        %v643 = vadd.f32 %v399, %v642
        %v644 = vpop.f32.mrb[0].mxu0
        %v645 = vpop.f32.mrb[0].mxu0
        %v646 = vadd.f32 %v399, %v645
        %v647 = vpop.f32.mrb[0].mxu0
        %648 = vmatprep.mubr.bf16.mxu0 0
        %649 = vmatmul.mubr.bf16.gmra.mrb[0].mxu0 %v519
        %v650 = vpop.f32.mrb[0].mxu0
        %v651 = vadd.f32 %v399, %v650
        %v652 = vpop.f32.mrb[0].mxu0
        %v653 = vpop.f32.mrb[0].mxu0
        %v654 = vadd.f32 %v399, %v653
        %v655 = vpop.f32.mrb[0].mxu0
        %656 = vmatprep.mubr.bf16.mxu0 0
        %657 = vmatmul.mubr.bf16.gmra.mrb[0].mxu0 %v522
        %v658 = vpop.f32.mrb[0].mxu0
        %v659 = vadd.f32 %v399, %v658
        %v660 = vpop.f32.mrb[0].mxu0
        %v661 = vpop.f32.mrb[0].mxu0
        %v662 = vadd.f32 %v399, %v661
        %v663 = vpop.f32.mrb[0].mxu0
        %664 = vmatprep.mubr.bf16.mxu0 0
        %665 = vmatmul.mubr.bf16.gmra.mrb[0].mxu0 %v525
        %v666 = vpop.f32.mrb[0].mxu0
        %v667 = vadd.f32 %v399, %v666
        %v668 = vpop.f32.mrb[0].mxu0
        %v669 = vpop.f32.mrb[0].mxu0
        %v670 = vadd.f32 %v399, %v669
        %v671 = vpop.f32.mrb[0].mxu0
        %672 = vmatprep.mubr.bf16.mxu0 0
        %673 = vmatmul.mubr.bf16.gmra.mrb[0].mxu0 %v528
        %v674 = vpop.f32.mrb[0].mxu0
        %v675 = vadd.f32 %v399, %v674
        %v676 = vpop.f32.mrb[0].mxu0
        %v677 = vpop.f32.mrb[0].mxu0
        %v678 = vadd.f32 %v399, %v677
        %v679 = vpop.f32.mrb[0].mxu0
        %680 = vmatprep.mubr.bf16.mxu0 0
        %681 = vmatmul.mubr.bf16.gmra.mrb[0].mxu0 %v531
        %v682 = vpop.f32.mrb[0].mxu0
        %v683 = vadd.f32 %v399, %v682
        %v684 = vpop.f32.mrb[0].mxu0
        %v685 = vpop.f32.mrb[0].mxu0
        %v686 = vadd.f32 %v399, %v685
        %v687 = vpop.f32.mrb[0].mxu0
        %688 = vmatprep.mubr.bf16.mxu0 0
        %689 = vmatmul.mubr.bf16.gmra.mrb[0].mxu0 %v534
        %v690 = vpop.f32.mrb[0].mxu0
        %v691 = vadd.f32 %v399, %v690
        %v692 = vpop.f32.mrb[0].mxu0
        %v693 = vpop.f32.mrb[0].mxu0
        %v694 = vadd.f32 %v399, %v693
        %v695 = vpop.f32.mrb[0].mxu0
        %696 = vdwg.mxu0
        %v697 = vld [vmem:[%s355] sm:$0xff]
        %v698 = vld [vmem:[%s355 + $0x8] sm:$0xff]
        %v699 = vld [vmem:[%s355 + $0x10] sm:$0xff]
        %v700 = vld [vmem:[%s355 + $0x18] sm:$0xff]
        %v701 = vld [vmem:[%s355 + $0x20] sm:$0xff]
        %v702 = vld [vmem:[%s355 + $0x28] sm:$0xff]
        %v703 = vld [vmem:[%s355 + $0x30] sm:$0xff]
        %v704 = vld [vmem:[%s355 + $0x38] sm:$0xff]
        %v705 = vld [vmem:[%s355 + $0x40] sm:$0xff]
        %v706 = vld [vmem:[%s355 + $0x48] sm:$0xff]
        %v707 = vld [vmem:[%s355 + $0x50] sm:$0xff]
        %v708 = vld [vmem:[%s355 + $0x58] sm:$0xff]
        %v709 = vld [vmem:[%s355 + $0x60] sm:$0xff]
        %v710 = vld [vmem:[%s355 + $0x68] sm:$0xff]
        %v711 = vld [vmem:[%s355 + $0x70] sm:$0xff]
        %v712 = vld [vmem:[%s355 + $0x78] sm:$0xff]
        %v713 = vld [vmem:[%s355 + $0x80] sm:$0xff]
        %v714 = vld [vmem:[%s355 + $0x88] sm:$0xff]
        %v715 = vld [vmem:[%s355 + $0x90] sm:$0xff]
        %v716 = vld [vmem:[%s355 + $0x98] sm:$0xff]
        %v717 = vld [vmem:[%s355 + $0xa0] sm:$0xff]
        %v718 = vld [vmem:[%s355 + $0xa8] sm:$0xff]
        %v719 = vld [vmem:[%s355 + $0xb0] sm:$0xff]
        %v720 = vld [vmem:[%s355 + $0xb8] sm:$0xff]
        %v721 = vld [vmem:[%s355 + $0xc0] sm:$0xff]
        %v722 = vld [vmem:[%s355 + $0xc8] sm:$0xff]
        %v723 = vld [vmem:[%s355 + $0xd0] sm:$0xff]
        %v724 = vld [vmem:[%s355 + $0xd8] sm:$0xff]
        %v725 = vld [vmem:[%s355 + $0xe0] sm:$0xff]
        %v726 = vld [vmem:[%s355 + $0xe8] sm:$0xff]
        %v727 = vld [vmem:[%s355 + $0xf0] sm:$0xff]
        %v728 = vld [vmem:[%s355 + $0xf8] sm:$0xff]
        %v729 = vadd.f32 %v571, %v697
        %v730 = vadd.f32 %v574, %v698
        %v731 = vadd.f32 %v579, %v699
        %v732 = vadd.f32 %v582, %v700
        %v733 = vadd.f32 %v587, %v701
        %v734 = vadd.f32 %v590, %v702
        %v735 = vadd.f32 %v595, %v703
        %v736 = vadd.f32 %v598, %v704
        %v737 = vadd.f32 %v603, %v705
        %v738 = vadd.f32 %v606, %v706
        %v739 = vadd.f32 %v611, %v707
        %v740 = vadd.f32 %v614, %v708
        %v741 = vadd.f32 %v619, %v709
        %v742 = vadd.f32 %v622, %v710
        %v743 = vadd.f32 %v627, %v711
        %v744 = vadd.f32 %v630, %v712
        %v745 = vadd.f32 %v635, %v713
        %v746 = vadd.f32 %v638, %v714
        %v747 = vadd.f32 %v643, %v715
        %v748 = vadd.f32 %v646, %v716
        %v749 = vadd.f32 %v651, %v717
        %v750 = vadd.f32 %v654, %v718
        %v751 = vadd.f32 %v659, %v719
        %v752 = vadd.f32 %v662, %v720
        %v753 = vadd.f32 %v667, %v721
        %v754 = vadd.f32 %v670, %v722
        %v755 = vadd.f32 %v675, %v723
        %v756 = vadd.f32 %v678, %v724
        %v757 = vadd.f32 %v683, %v725
        %v758 = vadd.f32 %v686, %v726
        %v759 = vadd.f32 %v691, %v727
        %v760 = vadd.f32 %v694, %v728
        %v761 = vpack.c.bf16 %v730, %v729
        %v762 = vpack.c.bf16 %v732, %v731
        %v763 = vpack.c.bf16 %v734, %v733
        %v764 = vpack.c.bf16 %v736, %v735
        %v765 = vpack.c.bf16 %v738, %v737
        %v766 = vpack.c.bf16 %v740, %v739
        %v767 = vpack.c.bf16 %v742, %v741
        %v768 = vpack.c.bf16 %v744, %v743
        %v769 = vpack.c.bf16 %v746, %v745
        %v770 = vpack.c.bf16 %v748, %v747
        %v771 = vpack.c.bf16 %v750, %v749
        %v772 = vpack.c.bf16 %v752, %v751
        %v773 = vpack.c.bf16 %v754, %v753
        %v774 = vpack.c.bf16 %v756, %v755
        %v775 = vpack.c.bf16 %v758, %v757
        %v776 = vpack.c.bf16 %v760, %v759
        %v793 = vunpack.c.l.b16 %v761
        %v794 = vunpack.c.h.b16 %v761
        %v795 = vunpack.c.l.b16 %v762
        %v796 = vunpack.c.h.b16 %v762
        %v797 = vunpack.c.l.b16 %v763
        %v798 = vunpack.c.h.b16 %v763
        %v799 = vunpack.c.l.b16 %v764
        %v800 = vunpack.c.h.b16 %v764
        %v801 = vunpack.c.l.b16 %v765
        %v802 = vunpack.c.h.b16 %v765
        %v803 = vunpack.c.l.b16 %v766
        %v804 = vunpack.c.h.b16 %v766
        %v805 = vunpack.c.l.b16 %v767
        %v806 = vunpack.c.h.b16 %v767
        %v807 = vunpack.c.l.b16 %v768
        %v808 = vunpack.c.h.b16 %v768
        %v809 = vunpack.c.l.b16 %v769
        %v810 = vunpack.c.h.b16 %v769
        %v811 = vunpack.c.l.b16 %v770
        %v812 = vunpack.c.h.b16 %v770
        %v813 = vunpack.c.l.b16 %v771
        %v814 = vunpack.c.h.b16 %v771
        %v815 = vunpack.c.l.b16 %v772
        %v816 = vunpack.c.h.b16 %v772
        %v817 = vunpack.c.l.b16 %v773
        %v818 = vunpack.c.h.b16 %v773
        %v819 = vunpack.c.l.b16 %v774
        %v820 = vunpack.c.h.b16 %v774
        %v821 = vunpack.c.l.b16 %v775
        %v822 = vunpack.c.h.b16 %v775
        %v823 = vunpack.c.l.b16 %v776
        %v824 = vunpack.c.h.b16 %v776
        %v825 = vpack.c.b16 %v793, %v793
        %v826 = vpack.c.b16 %v794, %v794
        %v827 = vpack.c.b16 %v795, %v795
        %v828 = vpack.c.b16 %v796, %v796
        %v829 = vpack.c.b16 %v797, %v797
        %v830 = vpack.c.b16 %v798, %v798
        %v831 = vpack.c.b16 %v799, %v799
        %v832 = vpack.c.b16 %v800, %v800
        %v833 = vpack.c.b16 %v801, %v801
        %v834 = vpack.c.b16 %v802, %v802
        %v835 = vpack.c.b16 %v803, %v803
        %v836 = vpack.c.b16 %v804, %v804
        %v837 = vpack.c.b16 %v805, %v805
        %v838 = vpack.c.b16 %v806, %v806
        %v839 = vpack.c.b16 %v807, %v807
        %v840 = vpack.c.b16 %v808, %v808
        %v841 = vpack.c.b16 %v809, %v809
        %v842 = vpack.c.b16 %v810, %v810
        %v843 = vpack.c.b16 %v811, %v811
        %v844 = vpack.c.b16 %v812, %v812
        %v845 = vpack.c.b16 %v813, %v813
        %v846 = vpack.c.b16 %v814, %v814
        %v847 = vpack.c.b16 %v815, %v815
        %v848 = vpack.c.b16 %v816, %v816
        %v849 = vpack.c.b16 %v817, %v817
        %v850 = vpack.c.b16 %v818, %v818
        %v851 = vpack.c.b16 %v819, %v819
        %v852 = vpack.c.b16 %v820, %v820
        %v853 = vpack.c.b16 %v821, %v821
        %v854 = vpack.c.b16 %v822, %v822
        %v855 = vpack.c.b16 %v823, %v823
        %v856 = vpack.c.b16 %v824, %v824
        %889 = vst [vmem:[%s333] sm:$0xf] %v825
        %890 = vst [vmem:[%s333 + $0x4] sm:$0xf] %v826
        %891 = vst [vmem:[%s333 + $0x8] sm:$0xf] %v827
        %892 = vst [vmem:[%s333 + $0xc] sm:$0xf] %v828
        %893 = vst [vmem:[%s333 + $0x10] sm:$0xf] %v829
        %894 = vst [vmem:[%s333 + $0x14] sm:$0xf] %v830
        %895 = vst [vmem:[%s333 + $0x18] sm:$0xf] %v831
        %896 = vst [vmem:[%s333 + $0x1c] sm:$0xf] %v832
        %897 = vst [vmem:[%s333 + $0x20] sm:$0xf] %v833
        %898 = vst [vmem:[%s333 + $0x24] sm:$0xf] %v834
        %899 = vst [vmem:[%s333 + $0x28] sm:$0xf] %v835
        %900 = vst [vmem:[%s333 + $0x2c] sm:$0xf] %v836
        %901 = vst [vmem:[%s333 + $0x30] sm:$0xf] %v837
        %902 = vst [vmem:[%s333 + $0x34] sm:$0xf] %v838
        %903 = vst [vmem:[%s333 + $0x38] sm:$0xf] %v839
        %904 = vst [vmem:[%s333 + $0x3c] sm:$0xf] %v840
        %905 = vst [vmem:[%s333 + $0x40] sm:$0xf] %v841
        %906 = vst [vmem:[%s333 + $0x44] sm:$0xf] %v842
        %907 = vst [vmem:[%s333 + $0x48] sm:$0xf] %v843
        %908 = vst [vmem:[%s333 + $0x4c] sm:$0xf] %v844
        %909 = vst [vmem:[%s333 + $0x50] sm:$0xf] %v845
        %910 = vst [vmem:[%s333 + $0x54] sm:$0xf] %v846
        %911 = vst [vmem:[%s333 + $0x58] sm:$0xf] %v847
        %912 = vst [vmem:[%s333 + $0x5c] sm:$0xf] %v848
        %913 = vst [vmem:[%s333 + $0x60] sm:$0xf] %v849
        %914 = vst [vmem:[%s333 + $0x64] sm:$0xf] %v850
        %915 = vst [vmem:[%s333 + $0x68] sm:$0xf] %v851
        %916 = vst [vmem:[%s333 + $0x6c] sm:$0xf] %v852
        %917 = vst [vmem:[%s333 + $0x70] sm:$0xf] %v853
        %918 = vst [vmem:[%s333 + $0x74] sm:$0xf] %v854
        %919 = vst [vmem:[%s333 + $0x78] sm:$0xf] %v855
        %920 = vst [vmem:[%s333 + $0x7c] sm:$0xf] %v856
        %v921 = vld [vmem:[#allocation2] sm:$0xff]
        %v922 = vld [vmem:[#allocation2 + $0x8] sm:$0xff]
        %v923 = vld [vmem:[#allocation2 + $0x10] sm:$0xff]
        %v924 = vld [vmem:[#allocation2 + $0x18] sm:$0xff]
        %v925 = vld [vmem:[#allocation2 + $0x20] sm:$0xff]
        %v926 = vld [vmem:[#allocation2 + $0x28] sm:$0xff]
        %v927 = vld [vmem:[#allocation2 + $0x30] sm:$0xff]
        %v928 = vld [vmem:[#allocation2 + $0x38] sm:$0xff]
        %v929 = vld [vmem:[#allocation2 + $0x40] sm:$0xff]
        %v930 = vld [vmem:[#allocation2 + $0x48] sm:$0xff]
        %v931 = vld [vmem:[#allocation2 + $0x50] sm:$0xff]
        %v932 = vld [vmem:[#allocation2 + $0x58] sm:$0xff]
        %v933 = vld [vmem:[#allocation2 + $0x60] sm:$0xff]
        %v934 = vld [vmem:[#allocation2 + $0x68] sm:$0xff]
        %v935 = vld [vmem:[#allocation2 + $0x70] sm:$0xff]
        %v936 = vld [vmem:[#allocation2 + $0x78] sm:$0xff]
        %v937 = vld [vmem:[%s5] sm:$0x3]
        %v939 = vlaneseq
        %v940 = vshrl.u32 %v939, 7
        %v941 = vsub.s32 0, %v940
        %v942 = vrot.slane %v937, %v941
        %v943 = vlaneseq
        %v944 = vshrl.u32 %v943, 7
        %v945 = vsub.s32 1, %v944
        %v946 = vrot.slane %v937, %v945
        %v965 = vunpack.c.l.b16 %v921
        %v966 = vunpack.c.h.b16 %v921
        %v967 = vunpack.c.l.b16 %v922
        %v968 = vunpack.c.h.b16 %v922
        %v969 = vunpack.c.l.b16 %v923
        %v970 = vunpack.c.h.b16 %v923
        %v971 = vunpack.c.l.b16 %v924
        %v972 = vunpack.c.h.b16 %v924
        %v973 = vunpack.c.l.b16 %v925
        %v974 = vunpack.c.h.b16 %v925
        %v975 = vunpack.c.l.b16 %v926
        %v976 = vunpack.c.h.b16 %v926
        %v977 = vunpack.c.l.b16 %v927
        %v978 = vunpack.c.h.b16 %v927
        %v979 = vunpack.c.l.b16 %v928
        %v980 = vunpack.c.h.b16 %v928
        %v981 = vunpack.c.l.b16 %v929
        %v982 = vunpack.c.h.b16 %v929
        %v983 = vunpack.c.l.b16 %v930
        %v984 = vunpack.c.h.b16 %v930
        %v985 = vunpack.c.l.b16 %v931
        %v986 = vunpack.c.h.b16 %v931
        %v987 = vunpack.c.l.b16 %v932
        %v988 = vunpack.c.h.b16 %v932
        %v989 = vunpack.c.l.b16 %v933
        %v990 = vunpack.c.h.b16 %v933
        %v991 = vunpack.c.l.b16 %v934
        %v992 = vunpack.c.h.b16 %v934
        %v993 = vunpack.c.l.b16 %v935
        %v994 = vunpack.c.h.b16 %v935
        %v995 = vunpack.c.l.b16 %v936
        %v996 = vunpack.c.h.b16 %v936
        %v997 = vpack.c.b16 %v967, %v965
        %v998 = vpack.c.b16 %v968, %v966
        %v999 = vpack.c.b16 %v971, %v969
        %v1000 = vpack.c.b16 %v972, %v970
        %v1001 = vpack.c.b16 %v975, %v973
        %v1002 = vpack.c.b16 %v976, %v974
        %v1003 = vpack.c.b16 %v979, %v977
        %v1004 = vpack.c.b16 %v980, %v978
        %v1005 = vpack.c.b16 %v983, %v981
        %v1006 = vpack.c.b16 %v984, %v982
        %v1007 = vpack.c.b16 %v987, %v985
        %v1008 = vpack.c.b16 %v988, %v986
        %v1009 = vpack.c.b16 %v991, %v989
        %v1010 = vpack.c.b16 %v992, %v990
        %v1011 = vpack.c.b16 %v995, %v993
        %v1012 = vpack.c.b16 %v996, %v994
        %1029 = vmatprep.subr.bf16.mxu0 %v998
        %1030 = vmatpush1.bf16.msra.mxu0 %v997
        %1031 = vmatprep.subr.bf16.mxu0 %v1000
        %1032 = vmatpush1.bf16.msra.mxu0 %v999
        %1033 = vmatprep.subr.bf16.mxu0 %v1002
        %1034 = vmatpush1.bf16.msra.mxu0 %v1001
        %1035 = vmatprep.subr.bf16.mxu0 %v1004
        %1036 = vmatpush1.bf16.msra.mxu0 %v1003
        %1037 = vmatprep.subr.bf16.mxu0 %v1006
        %1038 = vmatpush1.bf16.msra.mxu0 %v1005
        %1039 = vmatprep.subr.bf16.mxu0 %v1008
        %1040 = vmatpush1.bf16.msra.mxu0 %v1007
        %1041 = vmatprep.subr.bf16.mxu0 %v1010
        %1042 = vmatpush1.bf16.msra.mxu0 %v1009
        %1043 = vmatprep.subr.bf16.mxu0 %v1012
        %1044 = vmatpush1.bf16.msra.mxu0 %v1011
        %1045 = vmatprep.subr.bf16.mxu0 0
        %1046 = vmatpush1.bf16.msra.mxu0 0
        %1047 = vmatprep.subr.bf16.mxu0 0
        %1048 = vmatpush1.bf16.msra.mxu0 0
        %1049 = vmatprep.subr.bf16.mxu0 0
        %1050 = vmatpush1.bf16.msra.mxu0 0
        %1051 = vmatprep.subr.bf16.mxu0 0
        %1052 = vmatpush1.bf16.msra.mxu0 0
        %1053 = vmatprep.subr.bf16.mxu0 0
        %1054 = vmatpush1.bf16.msra.mxu0 0
        %1055 = vmatprep.subr.bf16.mxu0 0
        %1056 = vmatpush1.bf16.msra.mxu0 0
        %1057 = vmatprep.subr.bf16.mxu0 0
        %1058 = vmatpush1.bf16.msra.mxu0 0
        %1059 = vmatprep.subr.bf16.mxu0 0
        %1060 = vmatpush1.bf16.msra.mxu0 0
        %1061 = vmatprep.mubr.bf16.mxu0 0
        %1062 = vmatmul.mubr.bf16.gmra.mrb[0].mxu0 %v761
        %v1063 = vpop.f32.mrb[0].mxu0
        %v1064 = vadd.f32 %v942, %v1063
        %v1065 = vpop.f32.mrb[0].mxu0
        %v1066 = vadd.f32 %v946, %v1065
        %v1067 = vpop.f32.mrb[0].mxu0
        %v1068 = vadd.f32 %v942, %v1067
        %v1069 = vpop.f32.mrb[0].mxu0
        %v1070 = vadd.f32 %v946, %v1069
        %1071 = vmatprep.mubr.bf16.mxu0 0
        %1072 = vmatmul.mubr.bf16.gmra.mrb[0].mxu0 %v762
        %v1073 = vpop.f32.mrb[0].mxu0
        %v1074 = vadd.f32 %v942, %v1073
        %v1075 = vpop.f32.mrb[0].mxu0
        %v1076 = vadd.f32 %v946, %v1075
        %v1077 = vpop.f32.mrb[0].mxu0
        %v1078 = vadd.f32 %v942, %v1077
        %v1079 = vpop.f32.mrb[0].mxu0
        %v1080 = vadd.f32 %v946, %v1079
        %1081 = vmatprep.mubr.bf16.mxu0 0
        %1082 = vmatmul.mubr.bf16.gmra.mrb[0].mxu0 %v763
        %v1083 = vpop.f32.mrb[0].mxu0
        %v1084 = vadd.f32 %v942, %v1083
        %v1085 = vpop.f32.mrb[0].mxu0
        %v1086 = vadd.f32 %v946, %v1085
        %v1087 = vpop.f32.mrb[0].mxu0
        %v1088 = vadd.f32 %v942, %v1087
        %v1089 = vpop.f32.mrb[0].mxu0
        %v1090 = vadd.f32 %v946, %v1089
        %1091 = vmatprep.mubr.bf16.mxu0 0
        %1092 = vmatmul.mubr.bf16.gmra.mrb[0].mxu0 %v764
        %v1093 = vpop.f32.mrb[0].mxu0
        %v1094 = vadd.f32 %v942, %v1093
        %v1095 = vpop.f32.mrb[0].mxu0
        %v1096 = vadd.f32 %v946, %v1095
        %v1097 = vpop.f32.mrb[0].mxu0
        %v1098 = vadd.f32 %v942, %v1097
        %v1099 = vpop.f32.mrb[0].mxu0
        %v1100 = vadd.f32 %v946, %v1099
        %1101 = vmatprep.mubr.bf16.mxu0 0
        %1102 = vmatmul.mubr.bf16.gmra.mrb[0].mxu0 %v765
        %v1103 = vpop.f32.mrb[0].mxu0
        %v1104 = vadd.f32 %v942, %v1103
        %v1105 = vpop.f32.mrb[0].mxu0
        %v1106 = vadd.f32 %v946, %v1105
        %v1107 = vpop.f32.mrb[0].mxu0
        %v1108 = vadd.f32 %v942, %v1107
        %v1109 = vpop.f32.mrb[0].mxu0
        %v1110 = vadd.f32 %v946, %v1109
        %1111 = vmatprep.mubr.bf16.mxu0 0
        %1112 = vmatmul.mubr.bf16.gmra.mrb[0].mxu0 %v766
        %v1113 = vpop.f32.mrb[0].mxu0
        %v1114 = vadd.f32 %v942, %v1113
        %v1115 = vpop.f32.mrb[0].mxu0
        %v1116 = vadd.f32 %v946, %v1115
        %v1117 = vpop.f32.mrb[0].mxu0
        %v1118 = vadd.f32 %v942, %v1117
        %v1119 = vpop.f32.mrb[0].mxu0
        %v1120 = vadd.f32 %v946, %v1119
        %1121 = vmatprep.mubr.bf16.mxu0 0
        %1122 = vmatmul.mubr.bf16.gmra.mrb[0].mxu0 %v767
        %v1123 = vpop.f32.mrb[0].mxu0
        %v1124 = vadd.f32 %v942, %v1123
        %v1125 = vpop.f32.mrb[0].mxu0
        %v1126 = vadd.f32 %v946, %v1125
        %v1127 = vpop.f32.mrb[0].mxu0
        %v1128 = vadd.f32 %v942, %v1127
        %v1129 = vpop.f32.mrb[0].mxu0
        %v1130 = vadd.f32 %v946, %v1129
        %1131 = vmatprep.mubr.bf16.mxu0 0
        %1132 = vmatmul.mubr.bf16.gmra.mrb[0].mxu0 %v768
        %v1133 = vpop.f32.mrb[0].mxu0
        %v1134 = vadd.f32 %v942, %v1133
        %v1135 = vpop.f32.mrb[0].mxu0
        %v1136 = vadd.f32 %v946, %v1135
        %v1137 = vpop.f32.mrb[0].mxu0
        %v1138 = vadd.f32 %v942, %v1137
        %v1139 = vpop.f32.mrb[0].mxu0
        %v1140 = vadd.f32 %v946, %v1139
        %1141 = vmatprep.mubr.bf16.mxu0 0
        %1142 = vmatmul.mubr.bf16.gmra.mrb[0].mxu0 %v769
        %v1143 = vpop.f32.mrb[0].mxu0
        %v1144 = vadd.f32 %v942, %v1143
        %v1145 = vpop.f32.mrb[0].mxu0
        %v1146 = vadd.f32 %v946, %v1145
        %v1147 = vpop.f32.mrb[0].mxu0
        %v1148 = vadd.f32 %v942, %v1147
        %v1149 = vpop.f32.mrb[0].mxu0
        %v1150 = vadd.f32 %v946, %v1149
        %1151 = vmatprep.mubr.bf16.mxu0 0
        %1152 = vmatmul.mubr.bf16.gmra.mrb[0].mxu0 %v770
        %v1153 = vpop.f32.mrb[0].mxu0
        %v1154 = vadd.f32 %v942, %v1153
        %v1155 = vpop.f32.mrb[0].mxu0
        %v1156 = vadd.f32 %v946, %v1155
        %v1157 = vpop.f32.mrb[0].mxu0
        %v1158 = vadd.f32 %v942, %v1157
        %v1159 = vpop.f32.mrb[0].mxu0
        %v1160 = vadd.f32 %v946, %v1159
        %1161 = vmatprep.mubr.bf16.mxu0 0
        %1162 = vmatmul.mubr.bf16.gmra.mrb[0].mxu0 %v771
        %v1163 = vpop.f32.mrb[0].mxu0
        %v1164 = vadd.f32 %v942, %v1163
        %v1165 = vpop.f32.mrb[0].mxu0
        %v1166 = vadd.f32 %v946, %v1165
        %v1167 = vpop.f32.mrb[0].mxu0
        %v1168 = vadd.f32 %v942, %v1167
        %v1169 = vpop.f32.mrb[0].mxu0
        %v1170 = vadd.f32 %v946, %v1169
        %1171 = vmatprep.mubr.bf16.mxu0 0
        %1172 = vmatmul.mubr.bf16.gmra.mrb[0].mxu0 %v772
        %v1173 = vpop.f32.mrb[0].mxu0
        %v1174 = vadd.f32 %v942, %v1173
        %v1175 = vpop.f32.mrb[0].mxu0
        %v1176 = vadd.f32 %v946, %v1175
        %v1177 = vpop.f32.mrb[0].mxu0
        %v1178 = vadd.f32 %v942, %v1177
        %v1179 = vpop.f32.mrb[0].mxu0
        %v1180 = vadd.f32 %v946, %v1179
        %1181 = vmatprep.mubr.bf16.mxu0 0
        %1182 = vmatmul.mubr.bf16.gmra.mrb[0].mxu0 %v773
        %v1183 = vpop.f32.mrb[0].mxu0
        %v1184 = vadd.f32 %v942, %v1183
        %v1185 = vpop.f32.mrb[0].mxu0
        %v1186 = vadd.f32 %v946, %v1185
        %v1187 = vpop.f32.mrb[0].mxu0
        %v1188 = vadd.f32 %v942, %v1187
        %v1189 = vpop.f32.mrb[0].mxu0
        %v1190 = vadd.f32 %v946, %v1189
        %1191 = vmatprep.mubr.bf16.mxu0 0
        %1192 = vmatmul.mubr.bf16.gmra.mrb[0].mxu0 %v774
        %v1193 = vpop.f32.mrb[0].mxu0
        %v1194 = vadd.f32 %v942, %v1193
        %v1195 = vpop.f32.mrb[0].mxu0
        %v1196 = vadd.f32 %v946, %v1195
        %v1197 = vpop.f32.mrb[0].mxu0
        %v1198 = vadd.f32 %v942, %v1197
        %v1199 = vpop.f32.mrb[0].mxu0
        %v1200 = vadd.f32 %v946, %v1199
        %1201 = vmatprep.mubr.bf16.mxu0 0
        %1202 = vmatmul.mubr.bf16.gmra.mrb[0].mxu0 %v775
        %v1203 = vpop.f32.mrb[0].mxu0
        %v1204 = vadd.f32 %v942, %v1203
        %v1205 = vpop.f32.mrb[0].mxu0
        %v1206 = vadd.f32 %v946, %v1205
        %v1207 = vpop.f32.mrb[0].mxu0
        %v1208 = vadd.f32 %v942, %v1207
        %v1209 = vpop.f32.mrb[0].mxu0
        %v1210 = vadd.f32 %v946, %v1209
        %1211 = vmatprep.mubr.bf16.mxu0 0
        %1212 = vmatmul.mubr.bf16.gmra.mrb[0].mxu0 %v776
        %v1213 = vpop.f32.mrb[0].mxu0
        %v1214 = vadd.f32 %v942, %v1213
        %v1215 = vpop.f32.mrb[0].mxu0
        %v1216 = vadd.f32 %v946, %v1215
        %v1217 = vpop.f32.mrb[0].mxu0
        %v1218 = vadd.f32 %v942, %v1217
        %v1219 = vpop.f32.mrb[0].mxu0
        %v1220 = vadd.f32 %v946, %v1219
        %1221 = vdwg.mxu0
        %v1222 = vpack.c.bf16 %v1068, %v1064
        %v1223 = vpack.c.bf16 %v1070, %v1066
        %v1224 = vpack.c.bf16 %v1078, %v1074
        %v1225 = vpack.c.bf16 %v1080, %v1076
        %v1226 = vpack.c.bf16 %v1088, %v1084
        %v1227 = vpack.c.bf16 %v1090, %v1086
        %v1228 = vpack.c.bf16 %v1098, %v1094
        %v1229 = vpack.c.bf16 %v1100, %v1096
        %v1230 = vpack.c.bf16 %v1108, %v1104
        %v1231 = vpack.c.bf16 %v1110, %v1106
        %v1232 = vpack.c.bf16 %v1118, %v1114
        %v1233 = vpack.c.bf16 %v1120, %v1116
        %v1234 = vpack.c.bf16 %v1128, %v1124
        %v1235 = vpack.c.bf16 %v1130, %v1126
        %v1236 = vpack.c.bf16 %v1138, %v1134
        %v1237 = vpack.c.bf16 %v1140, %v1136
        %v1238 = vpack.c.bf16 %v1148, %v1144
        %v1239 = vpack.c.bf16 %v1150, %v1146
        %v1240 = vpack.c.bf16 %v1158, %v1154
        %v1241 = vpack.c.bf16 %v1160, %v1156
        %v1242 = vpack.c.bf16 %v1168, %v1164
        %v1243 = vpack.c.bf16 %v1170, %v1166
        %v1244 = vpack.c.bf16 %v1178, %v1174
        %v1245 = vpack.c.bf16 %v1180, %v1176
        %v1246 = vpack.c.bf16 %v1188, %v1184
        %v1247 = vpack.c.bf16 %v1190, %v1186
        %v1248 = vpack.c.bf16 %v1198, %v1194
        %v1249 = vpack.c.bf16 %v1200, %v1196
        %v1250 = vpack.c.bf16 %v1208, %v1204
        %v1251 = vpack.c.bf16 %v1210, %v1206
        %v1252 = vpack.c.bf16 %v1218, %v1214
        %v1253 = vpack.c.bf16 %v1220, %v1216
        %v1286 = vunpack.c.l.b16 %v1222
        %v1287 = vunpack.c.l.b16 %v1223
        %v1288 = vunpack.c.h.b16 %v1222
        %v1289 = vunpack.c.h.b16 %v1223
        %v1290 = vunpack.c.l.b16 %v1224
        %v1291 = vunpack.c.l.b16 %v1225
        %v1292 = vunpack.c.h.b16 %v1224
        %v1293 = vunpack.c.h.b16 %v1225
        %v1294 = vunpack.c.l.b16 %v1226
        %v1295 = vunpack.c.l.b16 %v1227
        %v1296 = vunpack.c.h.b16 %v1226
        %v1297 = vunpack.c.h.b16 %v1227
        %v1298 = vunpack.c.l.b16 %v1228
        %v1299 = vunpack.c.l.b16 %v1229
        %v1300 = vunpack.c.h.b16 %v1228
        %v1301 = vunpack.c.h.b16 %v1229
        %v1302 = vunpack.c.l.b16 %v1230
        %v1303 = vunpack.c.l.b16 %v1231
        %v1304 = vunpack.c.h.b16 %v1230
        %v1305 = vunpack.c.h.b16 %v1231
        %v1306 = vunpack.c.l.b16 %v1232
        %v1307 = vunpack.c.l.b16 %v1233
        %v1308 = vunpack.c.h.b16 %v1232
        %v1309 = vunpack.c.h.b16 %v1233
        %v1310 = vunpack.c.l.b16 %v1234
        %v1311 = vunpack.c.l.b16 %v1235
        %v1312 = vunpack.c.h.b16 %v1234
        %v1313 = vunpack.c.h.b16 %v1235
        %v1314 = vunpack.c.l.b16 %v1236
        %v1315 = vunpack.c.l.b16 %v1237
        %v1316 = vunpack.c.h.b16 %v1236
        %v1317 = vunpack.c.h.b16 %v1237
        %v1318 = vunpack.c.l.b16 %v1238
        %v1319 = vunpack.c.l.b16 %v1239
        %v1320 = vunpack.c.h.b16 %v1238
        %v1321 = vunpack.c.h.b16 %v1239
        %v1322 = vunpack.c.l.b16 %v1240
        %v1323 = vunpack.c.l.b16 %v1241
        %v1324 = vunpack.c.h.b16 %v1240
        %v1325 = vunpack.c.h.b16 %v1241
        %v1326 = vunpack.c.l.b16 %v1242
        %v1327 = vunpack.c.l.b16 %v1243
        %v1328 = vunpack.c.h.b16 %v1242
        %v1329 = vunpack.c.h.b16 %v1243
        %v1330 = vunpack.c.l.b16 %v1244
        %v1331 = vunpack.c.l.b16 %v1245
        %v1332 = vunpack.c.h.b16 %v1244
        %v1333 = vunpack.c.h.b16 %v1245
        %v1334 = vunpack.c.l.b16 %v1246
        %v1335 = vunpack.c.l.b16 %v1247
        %v1336 = vunpack.c.h.b16 %v1246
        %v1337 = vunpack.c.h.b16 %v1247
        %v1338 = vunpack.c.l.b16 %v1248
        %v1339 = vunpack.c.l.b16 %v1249
        %v1340 = vunpack.c.h.b16 %v1248
        %v1341 = vunpack.c.h.b16 %v1249
        %v1342 = vunpack.c.l.b16 %v1250
        %v1343 = vunpack.c.l.b16 %v1251
        %v1344 = vunpack.c.h.b16 %v1250
        %v1345 = vunpack.c.h.b16 %v1251
        %v1346 = vunpack.c.l.b16 %v1252
        %v1347 = vunpack.c.l.b16 %v1253
        %v1348 = vunpack.c.h.b16 %v1252
        %v1349 = vunpack.c.h.b16 %v1253
        %v1350 = vpack.c.b16 %v1287, %v1286
        %v1351 = vpack.c.b16 %v1289, %v1288
        %v1352 = vpack.c.b16 %v1291, %v1290
        %v1353 = vpack.c.b16 %v1293, %v1292
        %v1354 = vpack.c.b16 %v1295, %v1294
        %v1355 = vpack.c.b16 %v1297, %v1296
        %v1356 = vpack.c.b16 %v1299, %v1298
        %v1357 = vpack.c.b16 %v1301, %v1300
        %v1358 = vpack.c.b16 %v1303, %v1302
        %v1359 = vpack.c.b16 %v1305, %v1304
        %v1360 = vpack.c.b16 %v1307, %v1306
        %v1361 = vpack.c.b16 %v1309, %v1308
        %v1362 = vpack.c.b16 %v1311, %v1310
        %v1363 = vpack.c.b16 %v1313, %v1312
        %v1364 = vpack.c.b16 %v1315, %v1314
        %v1365 = vpack.c.b16 %v1317, %v1316
        %v1366 = vpack.c.b16 %v1319, %v1318
        %v1367 = vpack.c.b16 %v1321, %v1320
        %v1368 = vpack.c.b16 %v1323, %v1322
        %v1369 = vpack.c.b16 %v1325, %v1324
        %v1370 = vpack.c.b16 %v1327, %v1326
        %v1371 = vpack.c.b16 %v1329, %v1328
        %v1372 = vpack.c.b16 %v1331, %v1330
        %v1373 = vpack.c.b16 %v1333, %v1332
        %v1374 = vpack.c.b16 %v1335, %v1334
        %v1375 = vpack.c.b16 %v1337, %v1336
        %v1376 = vpack.c.b16 %v1339, %v1338
        %v1377 = vpack.c.b16 %v1341, %v1340
        %v1378 = vpack.c.b16 %v1343, %v1342
        %v1379 = vpack.c.b16 %v1345, %v1344
        %v1380 = vpack.c.b16 %v1347, %v1346
        %v1381 = vpack.c.b16 %v1349, %v1348
        %1414 = vst [vmem:[%s340] sm:$0xff] %v1350
        %1415 = vst [vmem:[%s340 + $0x8] sm:$0xff] %v1351
        %1416 = vst [vmem:[%s340 + $0x10] sm:$0xff] %v1352
        %1417 = vst [vmem:[%s340 + $0x18] sm:$0xff] %v1353
        %1418 = vst [vmem:[%s340 + $0x20] sm:$0xff] %v1354
        %1419 = vst [vmem:[%s340 + $0x28] sm:$0xff] %v1355
        %1420 = vst [vmem:[%s340 + $0x30] sm:$0xff] %v1356
        %1421 = vst [vmem:[%s340 + $0x38] sm:$0xff] %v1357
        %1422 = vst [vmem:[%s340 + $0x40] sm:$0xff] %v1358
        %1423 = vst [vmem:[%s340 + $0x48] sm:$0xff] %v1359
        %1424 = vst [vmem:[%s340 + $0x50] sm:$0xff] %v1360
        %1425 = vst [vmem:[%s340 + $0x58] sm:$0xff] %v1361
        %1426 = vst [vmem:[%s340 + $0x60] sm:$0xff] %v1362
        %1427 = vst [vmem:[%s340 + $0x68] sm:$0xff] %v1363
        %1428 = vst [vmem:[%s340 + $0x70] sm:$0xff] %v1364
        %1429 = vst [vmem:[%s340 + $0x78] sm:$0xff] %v1365
        %1430 = vst [vmem:[%s340 + $0x80] sm:$0xff] %v1366
        %1431 = vst [vmem:[%s340 + $0x88] sm:$0xff] %v1367
        %1432 = vst [vmem:[%s340 + $0x90] sm:$0xff] %v1368
        %1433 = vst [vmem:[%s340 + $0x98] sm:$0xff] %v1369
        %1434 = vst [vmem:[%s340 + $0xa0] sm:$0xff] %v1370
        %1435 = vst [vmem:[%s340 + $0xa8] sm:$0xff] %v1371
        %1436 = vst [vmem:[%s340 + $0xb0] sm:$0xff] %v1372
        %1437 = vst [vmem:[%s340 + $0xb8] sm:$0xff] %v1373
        %1438 = vst [vmem:[%s340 + $0xc0] sm:$0xff] %v1374
        %1439 = vst [vmem:[%s340 + $0xc8] sm:$0xff] %v1375
        %1440 = vst [vmem:[%s340 + $0xd0] sm:$0xff] %v1376
        %1441 = vst [vmem:[%s340 + $0xd8] sm:$0xff] %v1377
        %1442 = vst [vmem:[%s340 + $0xe0] sm:$0xff] %v1378
        %1443 = vst [vmem:[%s340 + $0xe8] sm:$0xff] %v1379
        %1444 = vst [vmem:[%s340 + $0xf0] sm:$0xff] %v1380
        %1445 = vst [vmem:[%s340 + $0xf8] sm:$0xff] %v1381
        %s1446 = sand.u32 %s186, 1
        %s1447 = scalar_lea.sflag [#allocation4], %s1446
        %s1448 = sand.u32 %s186, 1
        %s1449 = smul.addr %s1448, 128
        %s1450 = scalar_lea.vmem [#allocation5], %s1449
        %s1451 = sand.u32 %s214, 1
        %s1452 = scalar_lea.sflag [#allocation7], %s1451
        %s1453 = sand.u32 %s214, 1
        %s1454 = smul.addr %s1453, 256
        %s1455 = scalar_lea.vmem [#allocation6], %s1454
        // Predicated region
        $region49: #{tpu_custom_call.1} parent=43 // pred_check
          %p1456 = pneg %p196
        $region50: #{tpu_custom_call.1} parent=43 // pred_check_branch
          %1458 = sbr.rel (%p1456) target = $region52
        $region51: #{tpu_custom_call.1} parent=43 // pred_region
          %s1459 = smul.u32 32, %s31
          %s1461 = ssub.s32 2048, 2048
          %1462 = vsyncadd %s1447, %s1461
          %s1463 = smul.addr %s30, 64
          %s1464 = sadd.s32 %s1459, %s1463
          %s1465 = smul.addr %s1464, 64
          %s1466 = scalar_lea.hbm %s6, %s1465
          %s1467 = sshll.u32 %s1450, 4
          %s1468 = int_to_ptr.vmem [resolvable:$true] %s1467
          %1473 = dma.vmem_to_hbm [thread:$0]  %s1468, 2048, %s1466, %s1447, 64, 64, 4
        $region52: #{tpu_custom_call.1} parent=43 // pred_fallthru
          _
        // Predicated region
        $region53: #{tpu_custom_call.1} parent=43 // pred_check
          %p1474 = pneg %p224
        $region54: #{tpu_custom_call.1} parent=43 // pred_check_branch
          %1476 = sbr.rel (%p1474) target = $region56
        $region55: #{tpu_custom_call.1} parent=43 // pred_region
          %s1477 = smul.u32 32, %s31
          %s1479 = ssub.s32 4096, 4096
          %1480 = vsyncadd %s1452, %s1479
          %s1481 = smul.addr %s1477, 2
          %s1482 = smul.addr %s30, 128
          %s1483 = sadd.s32 %s1481, %s1482
          %s1484 = smul.addr %s1483, 64
          %s1485 = scalar_lea.hbm %s7, %s1484
          %s1486 = sshll.u32 %s1455, 4
          %s1487 = int_to_ptr.vmem [resolvable:$true] %s1486
          %1492 = dma.vmem_to_hbm [thread:$0]  %s1487, 4096, %s1485, %s1452, 128, 128, 8
        $region56: #{tpu_custom_call.1} parent=43 // pred_fallthru
          _
      $region44: #{tpu_custom_call.1} parent=5 // pred_fallthru
        _
      %p1493 = scmp.le.s32.totalorder 2, %s21
      // Predicated region
      $region57: #{tpu_custom_call.1} parent=5 // pred_check
        %p1494 = pneg %p1493
      $region58: #{tpu_custom_call.1} parent=5 // pred_check_branch
        %1496 = sbr.rel (%p1494) target = $region60
      $region59: #{tpu_custom_call.1} parent=5 // pred_region
        %s1497 = ssub.s32 %s21, 2
        // Predicated region
        $region61: #{tpu_custom_call.1} parent=59 // pred_check
          %p1498 = pneg %p202
        $region62: #{tpu_custom_call.1} parent=59 // pred_check_branch
          %1500 = sbr.rel (%p1498) target = $region64
        $region63: #{tpu_custom_call.1} parent=59 // pred_region
          %s1501 = sand.u32 %s187, 1
          %s1502 = scalar_lea.sflag [#allocation4], %s1501
          %s1503 = sand.u32 %s187, 1
          %s1504 = smul.addr %s1503, 128
          %s1505 = scalar_lea.vmem [#allocation5], %s1504
          %1506 = dma.done %s1502, 2048
        $region64: #{tpu_custom_call.1} parent=59 // pred_fallthru
          _
        // Predicated region
        $region65: #{tpu_custom_call.1} parent=59 // pred_check
          %p1507 = pneg %p230
        $region66: #{tpu_custom_call.1} parent=59 // pred_check_branch
          %1509 = sbr.rel (%p1507) target = $region68
        $region67: #{tpu_custom_call.1} parent=59 // pred_region
          %s1510 = sand.u32 %s215, 1
          %s1511 = scalar_lea.sflag [#allocation7], %s1510
          %s1512 = sand.u32 %s215, 1
          %s1513 = smul.addr %s1512, 256
          %s1514 = scalar_lea.vmem [#allocation6], %s1513
          %1515 = dma.done %s1511, 4096
        $region68: #{tpu_custom_call.1} parent=59 // pred_fallthru
          _
      $region60: #{tpu_custom_call.1} parent=5 // pred_fallthru
        _
    $region6: #{tpu_custom_call.1} parent=1 // loop_footer
      %s25 = sadd.s32 1, %s21
    $region7: #{tpu_custom_call.1} parent=1 // loop_footer_branch
      %20 = sbr.rel target = $region3
    $region8: #{tpu_custom_call.1} parent=1 // loop_exit
      _
    %1516 = vsyncpa [#allocation3], 1
    %s1517 = scalar_lea.sflag [#allocation3], 1
    %1518 = vsyncpa %s1517, 1
    %1519 = vsyncpa [#allocation4], 1
    %s1520 = scalar_lea.sflag [#allocation4], 1
    %1521 = vsyncpa %s1520, 1
    %1522 = vsyncpa [#allocation7], 1
    %s1523 = scalar_lea.sflag [#allocation7], 1
    %1524 = vsyncpa %s1523, 1

</llo_original>
